<compile_context>
chip_gen: v7x
topology: tpu7x:2x2x1
jax: 0.10.0
libtpu: 0.0.40
codegen_flags: <defaults>
</compile_context>

<pallas_src>
import math
import numpy as np
import jax
import jax.numpy as jnp
from jax import lax
from jax.experimental import pallas as pl
from jax.experimental.pallas import tpu as pltpu

_COS_EPS = 1e-8      # eps of torch.cosine_similarity (applied per-norm)
_DENOM_EPS = 1e-15   # clamp_min in vac_projection
_LANE = 128
_TARGET_BLOCK_BYTES = 4 * 1024 * 1024   # streamed block target (2-8 MiB sweet spot)


def _round_up(x: int, m: int) -> int:
    return -(-x // m) * m


def _vmem_budget_bytes() -> int:
    """Generation-aware VMEM budget (v7x: 64 MiB/TC, v5e/v6e: 128 MiB)."""
    cap = None
    try:
        cap = getattr(pltpu.get_tpu_info(), "vmem_capacity_bytes", None)
    except Exception:
        cap = None
    if not cap or cap <= 0:
        cap = 64 * 1024 * 1024           # conservative fallback (v7x per-TC VMEM)
    budget = int(cap) * 5 // 8           # headroom for Mosaic scratch / code / sems
    return max(16 * 1024 * 1024, min(budget, 96 * 1024 * 1024))


# ----------------------------------------------------------------------------
# Fused single-kernel path: Gram + K x K recurrence + combine, grads in VMEM.
# ----------------------------------------------------------------------------
def _make_fused_kernel(K: int):
    def kernel(g_ref, out_ref):
        x = g_ref[...]                                              # (K, D) native dtype
        gram = lax.dot_general(x, x, (((1,), (1,)), ((), ())),
                               preferred_element_type=jnp.float32)  # (K, K) f32
        for i in range(K):
            row = x[i:i + 1, :].astype(jnp.float32)                 # running g_i (1, D) f32
            d = [gram[i:i + 1, k:k + 1] for k in range(K)]          # <g_i, g_k> (1,1) f32
            sq = gram[i:i + 1, i:i + 1]                             # ||g_i||^2
            for j in range(K):                                      # fixed j order (see TODO)
                if j == i:
                    continue
                njsq = gram[j:j + 1, j:j + 1]
                norm_i = jnp.sqrt(sq)
                norm_j = jnp.sqrt(njsq)
                cos = d[j] / (jnp.maximum(norm_i, _COS_EPS) *
                              jnp.maximum(norm_j, _COS_EPS))
                coef = jnp.where(cos < 0.0,
                                 -cos * norm_i / jnp.maximum(norm_j, _DENOM_EPS),
                                 jnp.zeros_like(cos))
                row = row + coef * x[j:j + 1, :].astype(jnp.float32)
                sq = sq + 2.0 * coef * d[j] + coef * coef * njsq
                d = [d[k] + coef * gram[j:j + 1, k:k + 1] for k in range(K)]
            out_ref[i:i + 1, :] = row.astype(out_ref.dtype)
    return kernel


# ----------------------------------------------------------------------------
# Pass 1: per-core partial Gram matrices, accumulated over D tiles on the MXU.
# ----------------------------------------------------------------------------
def _make_gram_kernel(D: int, tile_d: int, cpc: int, needs_mask: bool):
    def kernel(g_ref, gram_ref):
        @pl.when(pl.program_id(1) == 0)
        def _():
            gram_ref[...] = jnp.zeros_like(gram_ref)

        x = g_ref[...]                                              # (K, tile_d) native dtype
        if needs_mask:
            # Mask ragged tail columns and the clamped duplicate chunk (odd
            # chunk counts): logical chunk id decides the global column offset.
            chunk = pl.program_id(0) * cpc + pl.program_id(1)
            col = chunk * tile_d + lax.broadcasted_iota(jnp.int32, x.shape, 1)
            x = jnp.where(col < D, x, jnp.zeros_like(x))
        gram_ref[0] = gram_ref[0] + lax.dot_general(
            x, x, dimension_numbers=(((1,), (1,)), ((), ())),
            preferred_element_type=jnp.float32)
    return kernel


# ----------------------------------------------------------------------------
# Pass 2: out = C @ grads (streaming combine, parallel over D tiles).
# ----------------------------------------------------------------------------
def _combine_kernel(c_ref, g_ref, out_ref):
    # TODO(synk): if the vex/MXU slot ever binds here (K<=8 with multi-MiB tiles
    # on v6e/v7x), switch to a VPU rank-1 formulation with sublane-broadcast
    # rows (g_ref[pl.ds(k, K, stride=0), :]) instead of the MXU dot.
    out_ref[...] = jnp.dot(c_ref[...], g_ref[...],
                           preferred_element_type=jnp.float32).astype(out_ref.dtype)


# ----------------------------------------------------------------------------
# Tiny K x K recurrence (sequential GradVac loop) in plain JAX, k-vectorized.
# ----------------------------------------------------------------------------
def _coeff_matrix(G: jax.Array, K: int) -> jax.Array:
    """Given the Gram matrix G (K, K) f32, return C (K, K) f32 such that
    new_grads[i] = sum_k C[i, k] * grads[k], matching the sequential loop."""
    rows = []
    for i in range(K):
        c = jnp.zeros((K,), jnp.float32).at[i].set(1.0)
        d = G[i, :]                      # dot(g_i, g_k), updated as g_i changes
        sq = G[i, i]                     # ||g_i||^2, updated as g_i changes
        for j in range(K):               # fixed j order (see TODO above)
            if j == i:
                continue
            njsq = G[j, j]
            norm_i = jnp.sqrt(sq)
            norm_j = jnp.sqrt(njsq)
            cos = d[j] / (jnp.maximum(norm_i, _COS_EPS) * jnp.maximum(norm_j, _COS_EPS))
            coef = jnp.where(cos < 0.0,
                             -cos * norm_i / jnp.maximum(norm_j, _DENOM_EPS),
                             jnp.float32(0.0))
            c = c.at[j].add(coef)
            # g_i <- g_i + coef * g_j  (g_j always the ORIGINAL gradient)
            sq = sq + 2.0 * coef * d[j] + coef * coef * njsq
            d = d + coef * G[j, :]
        rows.append(c)
    return jnp.stack(rows, axis=0)       # (K, K) f32


# ----------------------------------------------------------------------------
# Wrapper
# ----------------------------------------------------------------------------
def gradvac(grads: jax.Array, decay: float = 0.01, *, tile_d=None,
            force_two_pass: bool = False) -> jax.Array:
    """GradVac.forward. `decay` has no effect on the output of a single call
    (it only feeds the local, discarded EMA state in the reference)."""
    del decay
    K = int(grads.shape[0])
    size = grads.shape[1:]
    D = int(np.prod(size)) if len(size) > 0 else 1
    D = max(D, 1)
    flat = grads.reshape(K, D)

    itemsize = jnp.dtype(grads.dtype).itemsize
    sub = max(8, 32 // max(itemsize, 1))          # sublane packing (f32->8, bf16->16)
    Kpad = _round_up(K, sub)
    budget = _vmem_budget_bytes()

    # ----------------- fused single-kernel fast path --------------------------
    fused_bytes = Kpad * D * (2 * itemsize + 4)   # in + out + f32 row temporaries
    if (not force_two_pass) and K <= 8 and fused_bytes <= budget // 2:
        out = pl.pallas_call(
            _make_fused_kernel(K),
            out_shape=jax.ShapeDtypeStruct((K, D), grads.dtype),
            in_specs=[pl.BlockSpec(memory_space=pltpu.MemorySpace.VMEM)],
            out_specs=pl.BlockSpec(memory_space=pltpu.MemorySpace.VMEM),
            compiler_params=pltpu.CompilerParams(vmem_limit_bytes=budget),
            cost_estimate=pl.CostEstimate(flops=4 * K * K * D,
                                          transcendentals=2 * K * K,
                                          bytes_accessed=2 * K * D * itemsize),
        )(flat)
        return out.reshape(grads.shape)

    # ----------------- two-pass streaming path --------------------------------
    if tile_d is None:
        per_col = Kpad * (4 * itemsize + 4)       # 2 in bufs + 2 out bufs + f32 temp
        tile_cap = max(_LANE, (budget // per_col) // _LANE * _LANE)
        tile_tgt = max(_LANE, (_TARGET_BLOCK_BYTES // (Kpad * itemsize)) // _LANE * _LANE)
        tile_d = min(tile_tgt, tile_cap, _round_up(D, _LANE))
    tile_d = max(_LANE, _round_up(int(tile_d), _LANE))
    n_chunks = -(-D // tile_d)
    n_par = 2 if n_chunks >= 2 else 1             # split reduction across TCs (v7x); no-op on 1-TC chips
    cpc = -(-n_chunks // n_par)                   # chunks per core
    needs_mask = (D % tile_d != 0) or (n_par * cpc != n_chunks)

    # Pass 1: per-core partial Gram matrices (n_par, K, K) f32 on the MXU.
    gram_parts = pl.pallas_call(
        _make_gram_kernel(D, tile_d, cpc, needs_mask),
        out_shape=jax.ShapeDtypeStruct((n_par, K, K), jnp.float32),
        grid_spec=pltpu.PrefetchScalarGridSpec(
            num_scalar_prefetch=0,
            grid=(n_par, cpc),
            in_specs=[pl.BlockSpec(
                (K, tile_d),
                lambda c, d: (0, jnp.minimum(c * cpc + d, n_chunks - 1)))],
            out_specs=pl.BlockSpec((1, K, K), lambda c, d: (c, 0, 0)),
        ),
        compiler_params=pltpu.CompilerParams(
            dimension_semantics=("parallel", "arbitrary"),
            vmem_limit_bytes=budget),
        cost_estimate=pl.CostEstimate(
            flops=2 * K * K * D, transcendentals=0,
            bytes_accessed=K * D * itemsize + n_par * K * K * 4),
    )(flat)
    gram = jnp.sum(gram_parts, axis=0)

    # Sequential GradVac recurrence on K x K scalars (negligible work).
    C = _coeff_matrix(gram, K)
    # Feed the MXU its native dtype (bf16 x bf16 -> f32 runs at full rate); the
    # output is grads.dtype anyway so casting C costs no output precision.
    C_op = C if flat.dtype == jnp.float32 else C.astype(flat.dtype)

    # Pass 2: out = C @ grads, streamed over D tiles (ragged tail masked on store).
    out = pl.pallas_call(
        _combine_kernel,
        out_shape=jax.ShapeDtypeStruct((K, D), grads.dtype),
        grid_spec=pltpu.PrefetchScalarGridSpec(
            num_scalar_prefetch=0,
            grid=(n_chunks,),
            in_specs=[pl.BlockSpec((K, K), lambda d: (0, 0)),
                      pl.BlockSpec((K, tile_d), lambda d: (0, d))],
            out_specs=pl.BlockSpec((K, tile_d), lambda d: (0, d)),
        ),
        compiler_params=pltpu.CompilerParams(
            dimension_semantics=("parallel",),
            vmem_limit_bytes=budget),
        cost_estimate=pl.CostEstimate(
            flops=2 * K * K * D, transcendentals=0,
            bytes_accessed=2 * K * D * itemsize + K * K * jnp.dtype(C_op.dtype).itemsize),
    )(C_op, flat)
    return out.reshape(grads.shape)


# ----------------------------------------------------------------------------
# Pure-numpy reference (same fixed j order) for validation.
# ----------------------------------------------------------------------------
def _gradvac_ref(grads: np.ndarray) -> np.ndarray:
    K = grads.shape[0]
    flat = grads.reshape(K, -1).astype(np.float64)
    rows = []
    for i in range(K):
        g = flat[i].copy()
        for j in range(K):
            if j == i:
                continue
            gj = flat[j]
            ni = math.sqrt(float(np.dot(g, g)))
            nj = math.sqrt(float(np.dot(gj, gj)))
            cos = float(np.dot(g, gj)) / (max(ni, _COS_EPS) * max(nj, _COS_EPS))
            if cos < 0.0:
                g = g + (-cos) * ni / max(nj, _DENOM_EPS) * gj
        rows.append(g)
    return np.stack(rows, 0).reshape(grads.shape)


if __name__ == "__main__":
    key = jax.random.PRNGKey(0)
    k1, k2 = jax.random.split(key)

    # 4 tasks, each gradient shaped like a small conv-weight grad -> fused path.
    grads_a = jax.random.normal(k1, (4, 4, 16, 16), dtype=jnp.float32)
    run_fused = jax.jit(lambda g: gradvac(g, 0.01))
    out_a = jax.block_until_ready(run_fused(grads_a))
    np.testing.assert_allclose(np.asarray(out_a), _gradvac_ref(np.asarray(grads_a)),
                               rtol=1e-4, atol=1e-4)
    assert out_a.shape == grads_a.shape and out_a.dtype == grads_a.dtype

    # Ragged / odd-chunk case forced through the two-pass streaming path with a
    # small tile so the in-kernel Gram mask, the clamped index_map and the
    # two-core partial-Gram split are all exercised.
    grads_b = jax.random.normal(k2, (4, 7, 10, 10), dtype=jnp.float32)
    run_tiled = jax.jit(lambda g: gradvac(g, 0.01, tile_d=256, force_two_pass=True))
    out_b = jax.block_until_ready(run_tiled(grads_b))
    np.testing.assert_allclose(np.asarray(out_b), _gradvac_ref(np.asarray(grads_b)),
                               rtol=1e-4, atol=1e-4)
    assert out_b.shape == grads_b.shape and out_b.dtype == grads_b.dtype

    print("KERNEL_OK")
</pallas_src>

<mosaic_0001>
module attributes {stable_mosaic.version = 11 : i64} {
  func.func @kernel(%arg0: memref<4x1024xf32, #tpu.memory_space<vmem>>, %arg1: memref<4x1024xf32, #tpu.memory_space<vmem>>) attributes {dimension_semantics = [], scalar_prefetch = 0 : i64, scratch_operands = 0 : i64, tpu.core_type = #tpu.core_type<tc>} {
    %c0 = arith.constant 0 : index
    %c0_0 = arith.constant 0 : index
    %0 = vector.load %arg0[%c0, %c0_0] : memref<4x1024xf32, #tpu.memory_space<vmem>>, vector<4x1024xf32>
    %cst = arith.constant dense<0.000000e+00> : vector<4x4xf32>
    %1 = tpu.matmul %0, %0, %cst {dimension_numbers = #tpu.dot_dimension_numbers<[1], [1], [0], [0], [0, 0, 1, 0], [], []>} : vector<4x1024xf32>, vector<4x1024xf32>, vector<4x4xf32> -> vector<4x4xf32>
    %2 = vector.extract_strided_slice %0 {offsets = [0, 0], sizes = [1, 1024], strides = [1, 1]} : vector<4x1024xf32> to vector<1x1024xf32>
    %3 = vector.extract_strided_slice %1 {offsets = [0, 1], sizes = [1, 1], strides = [1, 1]} : vector<4x4xf32> to vector<1x1xf32>
    %4 = vector.extract_strided_slice %1 {offsets = [0, 2], sizes = [1, 1], strides = [1, 1]} : vector<4x4xf32> to vector<1x1xf32>
    %5 = vector.extract_strided_slice %1 {offsets = [0, 3], sizes = [1, 1], strides = [1, 1]} : vector<4x4xf32> to vector<1x1xf32>
    %6 = vector.extract_strided_slice %1 {offsets = [0, 0], sizes = [1, 1], strides = [1, 1]} : vector<4x4xf32> to vector<1x1xf32>
    %7 = vector.extract_strided_slice %1 {offsets = [1, 1], sizes = [1, 1], strides = [1, 1]} : vector<4x4xf32> to vector<1x1xf32>
    %8 = math.sqrt %6 : vector<1x1xf32>
    %9 = math.sqrt %7 : vector<1x1xf32>
    %cst_1 = arith.constant 9.99999993E-9 : f32
    %10 = vector.broadcast %cst_1 : f32 to vector<1x1xf32>
    %11 = arith.maximumf %8, %10 : vector<1x1xf32>
    %cst_2 = arith.constant 9.99999993E-9 : f32
    %12 = vector.broadcast %cst_2 : f32 to vector<1x1xf32>
    %13 = arith.maximumf %9, %12 : vector<1x1xf32>
    %14 = arith.mulf %11, %13 : vector<1x1xf32>
    %15 = arith.divf %3, %14 : vector<1x1xf32>
    %cst_3 = arith.constant 0.000000e+00 : f32
    %16 = vector.broadcast %cst_3 : f32 to vector<1x1xf32>
    %17 = arith.cmpf olt, %15, %16 : vector<1x1xf32>
    %cst_4 = arith.constant 0.000000e+00 : f32
    %18 = vector.broadcast %cst_4 : f32 to vector<1x1xf32>
    %19 = arith.subf %18, %15 : vector<1x1xf32>
    %20 = arith.mulf %19, %8 : vector<1x1xf32>
    %cst_5 = arith.constant 1.000000e-15 : f32
    %21 = vector.broadcast %cst_5 : f32 to vector<1x1xf32>
    %22 = arith.maximumf %9, %21 : vector<1x1xf32>
    %23 = arith.divf %20, %22 : vector<1x1xf32>
    %cst_6 = arith.constant 0.000000e+00 : f32
    %24 = vector.broadcast %cst_6 : f32 to vector<1x1xf32>
    %25 = arith.select %17, %23, %24 : vector<1x1xi1>, vector<1x1xf32>
    %26 = vector.extract_strided_slice %0 {offsets = [1, 0], sizes = [1, 1024], strides = [1, 1]} : vector<4x1024xf32> to vector<1x1024xf32>
    %27 = vector.broadcast %25 : vector<1x1xf32> to vector<1x1024xf32>
    %28 = arith.mulf %27, %26 : vector<1x1024xf32>
    %29 = arith.addf %2, %28 : vector<1x1024xf32>
    %cst_7 = arith.constant 2.000000e+00 : f32
    %30 = vector.broadcast %cst_7 : f32 to vector<1x1xf32>
    %31 = arith.mulf %30, %25 : vector<1x1xf32>
    %32 = arith.mulf %31, %3 : vector<1x1xf32>
    %33 = arith.addf %6, %32 : vector<1x1xf32>
    %34 = arith.mulf %25, %25 : vector<1x1xf32>
    %35 = arith.mulf %34, %7 : vector<1x1xf32>
    %36 = arith.addf %33, %35 : vector<1x1xf32>
    %37 = vector.extract_strided_slice %1 {offsets = [1, 2], sizes = [1, 1], strides = [1, 1]} : vector<4x4xf32> to vector<1x1xf32>
    %38 = arith.mulf %25, %37 : vector<1x1xf32>
    %39 = arith.addf %4, %38 : vector<1x1xf32>
    %40 = vector.extract_strided_slice %1 {offsets = [1, 3], sizes = [1, 1], strides = [1, 1]} : vector<4x4xf32> to vector<1x1xf32>
    %41 = arith.mulf %25, %40 : vector<1x1xf32>
    %42 = arith.addf %5, %41 : vector<1x1xf32>
    %43 = vector.extract_strided_slice %1 {offsets = [2, 2], sizes = [1, 1], strides = [1, 1]} : vector<4x4xf32> to vector<1x1xf32>
    %44 = math.sqrt %36 : vector<1x1xf32>
    %45 = math.sqrt %43 : vector<1x1xf32>
    %cst_8 = arith.constant 9.99999993E-9 : f32
    %46 = vector.broadcast %cst_8 : f32 to vector<1x1xf32>
    %47 = arith.maximumf %44, %46 : vector<1x1xf32>
    %cst_9 = arith.constant 9.99999993E-9 : f32
    %48 = vector.broadcast %cst_9 : f32 to vector<1x1xf32>
    %49 = arith.maximumf %45, %48 : vector<1x1xf32>
    %50 = arith.mulf %47, %49 : vector<1x1xf32>
    %51 = arith.divf %39, %50 : vector<1x1xf32>
    %cst_10 = arith.constant 0.000000e+00 : f32
    %52 = vector.broadcast %cst_10 : f32 to vector<1x1xf32>
    %53 = arith.cmpf olt, %51, %52 : vector<1x1xf32>
    %cst_11 = arith.constant 0.000000e+00 : f32
    %54 = vector.broadcast %cst_11 : f32 to vector<1x1xf32>
    %55 = arith.subf %54, %51 : vector<1x1xf32>
    %56 = arith.mulf %55, %44 : vector<1x1xf32>
    %cst_12 = arith.constant 1.000000e-15 : f32
    %57 = vector.broadcast %cst_12 : f32 to vector<1x1xf32>
    %58 = arith.maximumf %45, %57 : vector<1x1xf32>
    %59 = arith.divf %56, %58 : vector<1x1xf32>
    %cst_13 = arith.constant 0.000000e+00 : f32
    %60 = vector.broadcast %cst_13 : f32 to vector<1x1xf32>
    %61 = arith.select %53, %59, %60 : vector<1x1xi1>, vector<1x1xf32>
    %62 = vector.extract_strided_slice %0 {offsets = [2, 0], sizes = [1, 1024], strides = [1, 1]} : vector<4x1024xf32> to vector<1x1024xf32>
    %63 = vector.broadcast %61 : vector<1x1xf32> to vector<1x1024xf32>
    %64 = arith.mulf %63, %62 : vector<1x1024xf32>
    %65 = arith.addf %29, %64 : vector<1x1024xf32>
    %cst_14 = arith.constant 2.000000e+00 : f32
    %66 = vector.broadcast %cst_14 : f32 to vector<1x1xf32>
    %67 = arith.mulf %66, %61 : vector<1x1xf32>
    %68 = arith.mulf %67, %39 : vector<1x1xf32>
    %69 = arith.addf %36, %68 : vector<1x1xf32>
    %70 = arith.mulf %61, %61 : vector<1x1xf32>
    %71 = arith.mulf %70, %43 : vector<1x1xf32>
    %72 = arith.addf %69, %71 : vector<1x1xf32>
    %73 = vector.extract_strided_slice %1 {offsets = [2, 3], sizes = [1, 1], strides = [1, 1]} : vector<4x4xf32> to vector<1x1xf32>
    %74 = arith.mulf %61, %73 : vector<1x1xf32>
    %75 = arith.addf %42, %74 : vector<1x1xf32>
    %76 = vector.extract_strided_slice %1 {offsets = [3, 3], sizes = [1, 1], strides = [1, 1]} : vector<4x4xf32> to vector<1x1xf32>
    %77 = math.sqrt %72 : vector<1x1xf32>
    %78 = math.sqrt %76 : vector<1x1xf32>
    %cst_15 = arith.constant 9.99999993E-9 : f32
    %79 = vector.broadcast %cst_15 : f32 to vector<1x1xf32>
    %80 = arith.maximumf %77, %79 : vector<1x1xf32>
    %cst_16 = arith.constant 9.99999993E-9 : f32
    %81 = vector.broadcast %cst_16 : f32 to vector<1x1xf32>
    %82 = arith.maximumf %78, %81 : vector<1x1xf32>
    %83 = arith.mulf %80, %82 : vector<1x1xf32>
    %84 = arith.divf %75, %83 : vector<1x1xf32>
    %cst_17 = arith.constant 0.000000e+00 : f32
    %85 = vector.broadcast %cst_17 : f32 to vector<1x1xf32>
    %86 = arith.cmpf olt, %84, %85 : vector<1x1xf32>
    %cst_18 = arith.constant 0.000000e+00 : f32
    %87 = vector.broadcast %cst_18 : f32 to vector<1x1xf32>
    %88 = arith.subf %87, %84 : vector<1x1xf32>
    %89 = arith.mulf %88, %77 : vector<1x1xf32>
    %cst_19 = arith.constant 1.000000e-15 : f32
    %90 = vector.broadcast %cst_19 : f32 to vector<1x1xf32>
    %91 = arith.maximumf %78, %90 : vector<1x1xf32>
    %92 = arith.divf %89, %91 : vector<1x1xf32>
    %cst_20 = arith.constant 0.000000e+00 : f32
    %93 = vector.broadcast %cst_20 : f32 to vector<1x1xf32>
    %94 = arith.select %86, %92, %93 : vector<1x1xi1>, vector<1x1xf32>
    %95 = vector.extract_strided_slice %0 {offsets = [3, 0], sizes = [1, 1024], strides = [1, 1]} : vector<4x1024xf32> to vector<1x1024xf32>
    %96 = vector.broadcast %94 : vector<1x1xf32> to vector<1x1024xf32>
    %97 = arith.mulf %96, %95 : vector<1x1024xf32>
    %98 = arith.addf %65, %97 : vector<1x1024xf32>
    %c0_21 = arith.constant 0 : index
    %c0_22 = arith.constant 0 : index
    %99 = vector.load %arg1[%c0_21, %c0_22] : memref<4x1024xf32, #tpu.memory_space<vmem>>, vector<1x1024xf32>
    tpu.vector_store %arg1[%c0_21, %c0_22], %98 {strides = array<i32>} : memref<4x1024xf32, #tpu.memory_space<vmem>>, vector<1x1024xf32>,
    %100 = vector.extract_strided_slice %0 {offsets = [1, 0], sizes = [1, 1024], strides = [1, 1]} : vector<4x1024xf32> to vector<1x1024xf32>
    %101 = vector.extract_strided_slice %1 {offsets = [1, 0], sizes = [1, 1], strides = [1, 1]} : vector<4x4xf32> to vector<1x1xf32>
    %102 = vector.extract_strided_slice %1 {offsets = [1, 2], sizes = [1, 1], strides = [1, 1]} : vector<4x4xf32> to vector<1x1xf32>
    %103 = vector.extract_strided_slice %1 {offsets = [1, 3], sizes = [1, 1], strides = [1, 1]} : vector<4x4xf32> to vector<1x1xf32>
    %104 = vector.extract_strided_slice %1 {offsets = [1, 1], sizes = [1, 1], strides = [1, 1]} : vector<4x4xf32> to vector<1x1xf32>
    %105 = vector.extract_strided_slice %1 {offsets = [0, 0], sizes = [1, 1], strides = [1, 1]} : vector<4x4xf32> to vector<1x1xf32>
    %106 = math.sqrt %104 : vector<1x1xf32>
    %107 = math.sqrt %105 : vector<1x1xf32>
    %cst_23 = arith.constant 9.99999993E-9 : f32
    %108 = vector.broadcast %cst_23 : f32 to vector<1x1xf32>
    %109 = arith.maximumf %106, %108 : vector<1x1xf32>
    %cst_24 = arith.constant 9.99999993E-9 : f32
    %110 = vector.broadcast %cst_24 : f32 to vector<1x1xf32>
    %111 = arith.maximumf %107, %110 : vector<1x1xf32>
    %112 = arith.mulf %109, %111 : vector<1x1xf32>
    %113 = arith.divf %101, %112 : vector<1x1xf32>
    %cst_25 = arith.constant 0.000000e+00 : f32
    %114 = vector.broadcast %cst_25 : f32 to vector<1x1xf32>
    %115 = arith.cmpf olt, %113, %114 : vector<1x1xf32>
    %cst_26 = arith.constant 0.000000e+00 : f32
    %116 = vector.broadcast %cst_26 : f32 to vector<1x1xf32>
    %117 = arith.subf %116, %113 : vector<1x1xf32>
    %118 = arith.mulf %117, %106 : vector<1x1xf32>
    %cst_27 = arith.constant 1.000000e-15 : f32
    %119 = vector.broadcast %cst_27 : f32 to vector<1x1xf32>
    %120 = arith.maximumf %107, %119 : vector<1x1xf32>
    %121 = arith.divf %118, %120 : vector<1x1xf32>
    %cst_28 = arith.constant 0.000000e+00 : f32
    %122 = vector.broadcast %cst_28 : f32 to vector<1x1xf32>
    %123 = arith.select %115, %121, %122 : vector<1x1xi1>, vector<1x1xf32>
    %124 = vector.extract_strided_slice %0 {offsets = [0, 0], sizes = [1, 1024], strides = [1, 1]} : vector<4x1024xf32> to vector<1x1024xf32>
    %125 = vector.broadcast %123 : vector<1x1xf32> to vector<1x1024xf32>
    %126 = arith.mulf %125, %124 : vector<1x1024xf32>
    %127 = arith.addf %100, %126 : vector<1x1024xf32>
    %cst_29 = arith.constant 2.000000e+00 : f32
    %128 = vector.broadcast %cst_29 : f32 to vector<1x1xf32>
    %129 = arith.mulf %128, %123 : vector<1x1xf32>
    %130 = arith.mulf %129, %101 : vector<1x1xf32>
    %131 = arith.addf %104, %130 : vector<1x1xf32>
    %132 = arith.mulf %123, %123 : vector<1x1xf32>
    %133 = arith.mulf %132, %105 : vector<1x1xf32>
    %134 = arith.addf %131, %133 : vector<1x1xf32>
    %135 = vector.extract_strided_slice %1 {offsets = [0, 2], sizes = [1, 1], strides = [1, 1]} : vector<4x4xf32> to vector<1x1xf32>
    %136 = arith.mulf %123, %135 : vector<1x1xf32>
    %137 = arith.addf %102, %136 : vector<1x1xf32>
    %138 = vector.extract_strided_slice %1 {offsets = [0, 3], sizes = [1, 1], strides = [1, 1]} : vector<4x4xf32> to vector<1x1xf32>
    %139 = arith.mulf %123, %138 : vector<1x1xf32>
    %140 = arith.addf %103, %139 : vector<1x1xf32>
    %141 = vector.extract_strided_slice %1 {offsets = [2, 2], sizes = [1, 1], strides = [1, 1]} : vector<4x4xf32> to vector<1x1xf32>
    %142 = math.sqrt %134 : vector<1x1xf32>
    %143 = math.sqrt %141 : vector<1x1xf32>
    %cst_30 = arith.constant 9.99999993E-9 : f32
    %144 = vector.broadcast %cst_30 : f32 to vector<1x1xf32>
    %145 = arith.maximumf %142, %144 : vector<1x1xf32>
    %cst_31 = arith.constant 9.99999993E-9 : f32
    %146 = vector.broadcast %cst_31 : f32 to vector<1x1xf32>
    %147 = arith.maximumf %143, %146 : vector<1x1xf32>
    %148 = arith.mulf %145, %147 : vector<1x1xf32>
    %149 = arith.divf %137, %148 : vector<1x1xf32>
    %cst_32 = arith.constant 0.000000e+00 : f32
    %150 = vector.broadcast %cst_32 : f32 to vector<1x1xf32>
    %151 = arith.cmpf olt, %149, %150 : vector<1x1xf32>
    %cst_33 = arith.constant 0.000000e+00 : f32
    %152 = vector.broadcast %cst_33 : f32 to vector<1x1xf32>
    %153 = arith.subf %152, %149 : vector<1x1xf32>
    %154 = arith.mulf %153, %142 : vector<1x1xf32>
    %cst_34 = arith.constant 1.000000e-15 : f32
    %155 = vector.broadcast %cst_34 : f32 to vector<1x1xf32>
    %156 = arith.maximumf %143, %155 : vector<1x1xf32>
    %157 = arith.divf %154, %156 : vector<1x1xf32>
    %cst_35 = arith.constant 0.000000e+00 : f32
    %158 = vector.broadcast %cst_35 : f32 to vector<1x1xf32>
    %159 = arith.select %151, %157, %158 : vector<1x1xi1>, vector<1x1xf32>
    %160 = vector.extract_strided_slice %0 {offsets = [2, 0], sizes = [1, 1024], strides = [1, 1]} : vector<4x1024xf32> to vector<1x1024xf32>
    %161 = vector.broadcast %159 : vector<1x1xf32> to vector<1x1024xf32>
    %162 = arith.mulf %161, %160 : vector<1x1024xf32>
    %163 = arith.addf %127, %162 : vector<1x1024xf32>
    %cst_36 = arith.constant 2.000000e+00 : f32
    %164 = vector.broadcast %cst_36 : f32 to vector<1x1xf32>
    %165 = arith.mulf %164, %159 : vector<1x1xf32>
    %166 = arith.mulf %165, %137 : vector<1x1xf32>
    %167 = arith.addf %134, %166 : vector<1x1xf32>
    %168 = arith.mulf %159, %159 : vector<1x1xf32>
    %169 = arith.mulf %168, %141 : vector<1x1xf32>
    %170 = arith.addf %167, %169 : vector<1x1xf32>
    %171 = vector.extract_strided_slice %1 {offsets = [2, 3], sizes = [1, 1], strides = [1, 1]} : vector<4x4xf32> to vector<1x1xf32>
    %172 = arith.mulf %159, %171 : vector<1x1xf32>
    %173 = arith.addf %140, %172 : vector<1x1xf32>
    %174 = vector.extract_strided_slice %1 {offsets = [3, 3], sizes = [1, 1], strides = [1, 1]} : vector<4x4xf32> to vector<1x1xf32>
    %175 = math.sqrt %170 : vector<1x1xf32>
    %176 = math.sqrt %174 : vector<1x1xf32>
    %cst_37 = arith.constant 9.99999993E-9 : f32
    %177 = vector.broadcast %cst_37 : f32 to vector<1x1xf32>
    %178 = arith.maximumf %175, %177 : vector<1x1xf32>
    %cst_38 = arith.constant 9.99999993E-9 : f32
    %179 = vector.broadcast %cst_38 : f32 to vector<1x1xf32>
    %180 = arith.maximumf %176, %179 : vector<1x1xf32>
    %181 = arith.mulf %178, %180 : vector<1x1xf32>
    %182 = arith.divf %173, %181 : vector<1x1xf32>
    %cst_39 = arith.constant 0.000000e+00 : f32
    %183 = vector.broadcast %cst_39 : f32 to vector<1x1xf32>
    %184 = arith.cmpf olt, %182, %183 : vector<1x1xf32>
    %cst_40 = arith.constant 0.000000e+00 : f32
    %185 = vector.broadcast %cst_40 : f32 to vector<1x1xf32>
    %186 = arith.subf %185, %182 : vector<1x1xf32>
    %187 = arith.mulf %186, %175 : vector<1x1xf32>
    %cst_41 = arith.constant 1.000000e-15 : f32
    %188 = vector.broadcast %cst_41 : f32 to vector<1x1xf32>
    %189 = arith.maximumf %176, %188 : vector<1x1xf32>
    %190 = arith.divf %187, %189 : vector<1x1xf32>
    %cst_42 = arith.constant 0.000000e+00 : f32
    %191 = vector.broadcast %cst_42 : f32 to vector<1x1xf32>
    %192 = arith.select %184, %190, %191 : vector<1x1xi1>, vector<1x1xf32>
    %193 = vector.extract_strided_slice %0 {offsets = [3, 0], sizes = [1, 1024], strides = [1, 1]} : vector<4x1024xf32> to vector<1x1024xf32>
    %194 = vector.broadcast %192 : vector<1x1xf32> to vector<1x1024xf32>
    %195 = arith.mulf %194, %193 : vector<1x1024xf32>
    %196 = arith.addf %163, %195 : vector<1x1024xf32>
    %c1 = arith.constant 1 : index
    %c0_43 = arith.constant 0 : index
    %197 = vector.load %arg1[%c1, %c0_43] : memref<4x1024xf32, #tpu.memory_space<vmem>>, vector<1x1024xf32>
    tpu.vector_store %arg1[%c1, %c0_43], %196 {strides = array<i32>} : memref<4x1024xf32, #tpu.memory_space<vmem>>, vector<1x1024xf32>,
    %198 = vector.extract_strided_slice %0 {offsets = [2, 0], sizes = [1, 1024], strides = [1, 1]} : vector<4x1024xf32> to vector<1x1024xf32>
    %199 = vector.extract_strided_slice %1 {offsets = [2, 0], sizes = [1, 1], strides = [1, 1]} : vector<4x4xf32> to vector<1x1xf32>
    %200 = vector.extract_strided_slice %1 {offsets = [2, 1], sizes = [1, 1], strides = [1, 1]} : vector<4x4xf32> to vector<1x1xf32>
    %201 = vector.extract_strided_slice %1 {offsets = [2, 3], sizes = [1, 1], strides = [1, 1]} : vector<4x4xf32> to vector<1x1xf32>
    %202 = vector.extract_strided_slice %1 {offsets = [2, 2], sizes = [1, 1], strides = [1, 1]} : vector<4x4xf32> to vector<1x1xf32>
    %203 = vector.extract_strided_slice %1 {offsets = [0, 0], sizes = [1, 1], strides = [1, 1]} : vector<4x4xf32> to vector<1x1xf32>
    %204 = math.sqrt %202 : vector<1x1xf32>
    %205 = math.sqrt %203 : vector<1x1xf32>
    %cst_44 = arith.constant 9.99999993E-9 : f32
    %206 = vector.broadcast %cst_44 : f32 to vector<1x1xf32>
    %207 = arith.maximumf %204, %206 : vector<1x1xf32>
    %cst_45 = arith.constant 9.99999993E-9 : f32
    %208 = vector.broadcast %cst_45 : f32 to vector<1x1xf32>
    %209 = arith.maximumf %205, %208 : vector<1x1xf32>
    %210 = arith.mulf %207, %209 : vector<1x1xf32>
    %211 = arith.divf %199, %210 : vector<1x1xf32>
    %cst_46 = arith.constant 0.000000e+00 : f32
    %212 = vector.broadcast %cst_46 : f32 to vector<1x1xf32>
    %213 = arith.cmpf olt, %211, %212 : vector<1x1xf32>
    %cst_47 = arith.constant 0.000000e+00 : f32
    %214 = vector.broadcast %cst_47 : f32 to vector<1x1xf32>
    %215 = arith.subf %214, %211 : vector<1x1xf32>
    %216 = arith.mulf %215, %204 : vector<1x1xf32>
    %cst_48 = arith.constant 1.000000e-15 : f32
    %217 = vector.broadcast %cst_48 : f32 to vector<1x1xf32>
    %218 = arith.maximumf %205, %217 : vector<1x1xf32>
    %219 = arith.divf %216, %218 : vector<1x1xf32>
    %cst_49 = arith.constant 0.000000e+00 : f32
    %220 = vector.broadcast %cst_49 : f32 to vector<1x1xf32>
    %221 = arith.select %213, %219, %220 : vector<1x1xi1>, vector<1x1xf32>
    %222 = vector.extract_strided_slice %0 {offsets = [0, 0], sizes = [1, 1024], strides = [1, 1]} : vector<4x1024xf32> to vector<1x1024xf32>
    %223 = vector.broadcast %221 : vector<1x1xf32> to vector<1x1024xf32>
    %224 = arith.mulf %223, %222 : vector<1x1024xf32>
    %225 = arith.addf %198, %224 : vector<1x1024xf32>
    %cst_50 = arith.constant 2.000000e+00 : f32
    %226 = vector.broadcast %cst_50 : f32 to vector<1x1xf32>
    %227 = arith.mulf %226, %221 : vector<1x1xf32>
    %228 = arith.mulf %227, %199 : vector<1x1xf32>
    %229 = arith.addf %202, %228 : vector<1x1xf32>
    %230 = arith.mulf %221, %221 : vector<1x1xf32>
    %231 = arith.mulf %230, %203 : vector<1x1xf32>
    %232 = arith.addf %229, %231 : vector<1x1xf32>
    %233 = vector.extract_strided_slice %1 {offsets = [0, 1], sizes = [1, 1], strides = [1, 1]} : vector<4x4xf32> to vector<1x1xf32>
    %234 = arith.mulf %221, %233 : vector<1x1xf32>
    %235 = arith.addf %200, %234 : vector<1x1xf32>
    %236 = vector.extract_strided_slice %1 {offsets = [0, 3], sizes = [1, 1], strides = [1, 1]} : vector<4x4xf32> to vector<1x1xf32>
    %237 = arith.mulf %221, %236 : vector<1x1xf32>
    %238 = arith.addf %201, %237 : vector<1x1xf32>
    %239 = vector.extract_strided_slice %1 {offsets = [1, 1], sizes = [1, 1], strides = [1, 1]} : vector<4x4xf32> to vector<1x1xf32>
    %240 = math.sqrt %232 : vector<1x1xf32>
    %241 = math.sqrt %239 : vector<1x1xf32>
    %cst_51 = arith.constant 9.99999993E-9 : f32
    %242 = vector.broadcast %cst_51 : f32 to vector<1x1xf32>
    %243 = arith.maximumf %240, %242 : vector<1x1xf32>
    %cst_52 = arith.constant 9.99999993E-9 : f32
    %244 = vector.broadcast %cst_52 : f32 to vector<1x1xf32>
    %245 = arith.maximumf %241, %244 : vector<1x1xf32>
    %246 = arith.mulf %243, %245 : vector<1x1xf32>
    %247 = arith.divf %235, %246 : vector<1x1xf32>
    %cst_53 = arith.constant 0.000000e+00 : f32
    %248 = vector.broadcast %cst_53 : f32 to vector<1x1xf32>
    %249 = arith.cmpf olt, %247, %248 : vector<1x1xf32>
    %cst_54 = arith.constant 0.000000e+00 : f32
    %250 = vector.broadcast %cst_54 : f32 to vector<1x1xf32>
    %251 = arith.subf %250, %247 : vector<1x1xf32>
    %252 = arith.mulf %251, %240 : vector<1x1xf32>
    %cst_55 = arith.constant 1.000000e-15 : f32
    %253 = vector.broadcast %cst_55 : f32 to vector<1x1xf32>
    %254 = arith.maximumf %241, %253 : vector<1x1xf32>
    %255 = arith.divf %252, %254 : vector<1x1xf32>
    %cst_56 = arith.constant 0.000000e+00 : f32
    %256 = vector.broadcast %cst_56 : f32 to vector<1x1xf32>
    %257 = arith.select %249, %255, %256 : vector<1x1xi1>, vector<1x1xf32>
    %258 = vector.extract_strided_slice %0 {offsets = [1, 0], sizes = [1, 1024], strides = [1, 1]} : vector<4x1024xf32> to vector<1x1024xf32>
    %259 = vector.broadcast %257 : vector<1x1xf32> to vector<1x1024xf32>
    %260 = arith.mulf %259, %258 : vector<1x1024xf32>
    %261 = arith.addf %225, %260 : vector<1x1024xf32>
    %cst_57 = arith.constant 2.000000e+00 : f32
    %262 = vector.broadcast %cst_57 : f32 to vector<1x1xf32>
    %263 = arith.mulf %262, %257 : vector<1x1xf32>
    %264 = arith.mulf %263, %235 : vector<1x1xf32>
    %265 = arith.addf %232, %264 : vector<1x1xf32>
    %266 = arith.mulf %257, %257 : vector<1x1xf32>
    %267 = arith.mulf %266, %239 : vector<1x1xf32>
    %268 = arith.addf %265, %267 : vector<1x1xf32>
    %269 = vector.extract_strided_slice %1 {offsets = [1, 3], sizes = [1, 1], strides = [1, 1]} : vector<4x4xf32> to vector<1x1xf32>
    %270 = arith.mulf %257, %269 : vector<1x1xf32>
    %271 = arith.addf %238, %270 : vector<1x1xf32>
    %272 = vector.extract_strided_slice %1 {offsets = [3, 3], sizes = [1, 1], strides = [1, 1]} : vector<4x4xf32> to vector<1x1xf32>
    %273 = math.sqrt %268 : vector<1x1xf32>
    %274 = math.sqrt %272 : vector<1x1xf32>
    %cst_58 = arith.constant 9.99999993E-9 : f32
    %275 = vector.broadcast %cst_58 : f32 to vector<1x1xf32>
    %276 = arith.maximumf %273, %275 : vector<1x1xf32>
    %cst_59 = arith.constant 9.99999993E-9 : f32
    %277 = vector.broadcast %cst_59 : f32 to vector<1x1xf32>
    %278 = arith.maximumf %274, %277 : vector<1x1xf32>
    %279 = arith.mulf %276, %278 : vector<1x1xf32>
    %280 = arith.divf %271, %279 : vector<1x1xf32>
    %cst_60 = arith.constant 0.000000e+00 : f32
    %281 = vector.broadcast %cst_60 : f32 to vector<1x1xf32>
    %282 = arith.cmpf olt, %280, %281 : vector<1x1xf32>
    %cst_61 = arith.constant 0.000000e+00 : f32
    %283 = vector.broadcast %cst_61 : f32 to vector<1x1xf32>
    %284 = arith.subf %283, %280 : vector<1x1xf32>
    %285 = arith.mulf %284, %273 : vector<1x1xf32>
    %cst_62 = arith.constant 1.000000e-15 : f32
    %286 = vector.broadcast %cst_62 : f32 to vector<1x1xf32>
    %287 = arith.maximumf %274, %286 : vector<1x1xf32>
    %288 = arith.divf %285, %287 : vector<1x1xf32>
    %cst_63 = arith.constant 0.000000e+00 : f32
    %289 = vector.broadcast %cst_63 : f32 to vector<1x1xf32>
    %290 = arith.select %282, %288, %289 : vector<1x1xi1>, vector<1x1xf32>
    %291 = vector.extract_strided_slice %0 {offsets = [3, 0], sizes = [1, 1024], strides = [1, 1]} : vector<4x1024xf32> to vector<1x1024xf32>
    %292 = vector.broadcast %290 : vector<1x1xf32> to vector<1x1024xf32>
    %293 = arith.mulf %292, %291 : vector<1x1024xf32>
    %294 = arith.addf %261, %293 : vector<1x1024xf32>
    %c2 = arith.constant 2 : index
    %c0_64 = arith.constant 0 : index
    %295 = vector.load %arg1[%c2, %c0_64] : memref<4x1024xf32, #tpu.memory_space<vmem>>, vector<1x1024xf32>
    tpu.vector_store %arg1[%c2, %c0_64], %294 {strides = array<i32>} : memref<4x1024xf32, #tpu.memory_space<vmem>>, vector<1x1024xf32>,
    %296 = vector.extract_strided_slice %0 {offsets = [3, 0], sizes = [1, 1024], strides = [1, 1]} : vector<4x1024xf32> to vector<1x1024xf32>
    %297 = vector.extract_strided_slice %1 {offsets = [3, 0], sizes = [1, 1], strides = [1, 1]} : vector<4x4xf32> to vector<1x1xf32>
    %298 = vector.extract_strided_slice %1 {offsets = [3, 1], sizes = [1, 1], strides = [1, 1]} : vector<4x4xf32> to vector<1x1xf32>
    %299 = vector.extract_strided_slice %1 {offsets = [3, 2], sizes = [1, 1], strides = [1, 1]} : vector<4x4xf32> to vector<1x1xf32>
    %300 = vector.extract_strided_slice %1 {offsets = [3, 3], sizes = [1, 1], strides = [1, 1]} : vector<4x4xf32> to vector<1x1xf32>
    %301 = vector.extract_strided_slice %1 {offsets = [0, 0], sizes = [1, 1], strides = [1, 1]} : vector<4x4xf32> to vector<1x1xf32>
    %302 = math.sqrt %300 : vector<1x1xf32>
    %303 = math.sqrt %301 : vector<1x1xf32>
    %cst_65 = arith.constant 9.99999993E-9 : f32
    %304 = vector.broadcast %cst_65 : f32 to vector<1x1xf32>
    %305 = arith.maximumf %302, %304 : vector<1x1xf32>
    %cst_66 = arith.constant 9.99999993E-9 : f32
    %306 = vector.broadcast %cst_66 : f32 to vector<1x1xf32>
    %307 = arith.maximumf %303, %306 : vector<1x1xf32>
    %308 = arith.mulf %305, %307 : vector<1x1xf32>
    %309 = arith.divf %297, %308 : vector<1x1xf32>
    %cst_67 = arith.constant 0.000000e+00 : f32
    %310 = vector.broadcast %cst_67 : f32 to vector<1x1xf32>
    %311 = arith.cmpf olt, %309, %310 : vector<1x1xf32>
    %cst_68 = arith.constant 0.000000e+00 : f32
    %312 = vector.broadcast %cst_68 : f32 to vector<1x1xf32>
    %313 = arith.subf %312, %309 : vector<1x1xf32>
    %314 = arith.mulf %313, %302 : vector<1x1xf32>
    %cst_69 = arith.constant 1.000000e-15 : f32
    %315 = vector.broadcast %cst_69 : f32 to vector<1x1xf32>
    %316 = arith.maximumf %303, %315 : vector<1x1xf32>
    %317 = arith.divf %314, %316 : vector<1x1xf32>
    %cst_70 = arith.constant 0.000000e+00 : f32
    %318 = vector.broadcast %cst_70 : f32 to vector<1x1xf32>
    %319 = arith.select %311, %317, %318 : vector<1x1xi1>, vector<1x1xf32>
    %320 = vector.extract_strided_slice %0 {offsets = [0, 0], sizes = [1, 1024], strides = [1, 1]} : vector<4x1024xf32> to vector<1x1024xf32>
    %321 = vector.broadcast %319 : vector<1x1xf32> to vector<1x1024xf32>
    %322 = arith.mulf %321, %320 : vector<1x1024xf32>
    %323 = arith.addf %296, %322 : vector<1x1024xf32>
    %cst_71 = arith.constant 2.000000e+00 : f32
    %324 = vector.broadcast %cst_71 : f32 to vector<1x1xf32>
    %325 = arith.mulf %324, %319 : vector<1x1xf32>
    %326 = arith.mulf %325, %297 : vector<1x1xf32>
    %327 = arith.addf %300, %326 : vector<1x1xf32>
    %328 = arith.mulf %319, %319 : vector<1x1xf32>
    %329 = arith.mulf %328, %301 : vector<1x1xf32>
    %330 = arith.addf %327, %329 : vector<1x1xf32>
    %331 = vector.extract_strided_slice %1 {offsets = [0, 1], sizes = [1, 1], strides = [1, 1]} : vector<4x4xf32> to vector<1x1xf32>
    %332 = arith.mulf %319, %331 : vector<1x1xf32>
    %333 = arith.addf %298, %332 : vector<1x1xf32>
    %334 = vector.extract_strided_slice %1 {offsets = [0, 2], sizes = [1, 1], strides = [1, 1]} : vector<4x4xf32> to vector<1x1xf32>
    %335 = arith.mulf %319, %334 : vector<1x1xf32>
    %336 = arith.addf %299, %335 : vector<1x1xf32>
    %337 = vector.extract_strided_slice %1 {offsets = [1, 1], sizes = [1, 1], strides = [1, 1]} : vector<4x4xf32> to vector<1x1xf32>
    %338 = math.sqrt %330 : vector<1x1xf32>
    %339 = math.sqrt %337 : vector<1x1xf32>
    %cst_72 = arith.constant 9.99999993E-9 : f32
    %340 = vector.broadcast %cst_72 : f32 to vector<1x1xf32>
    %341 = arith.maximumf %338, %340 : vector<1x1xf32>
    %cst_73 = arith.constant 9.99999993E-9 : f32
    %342 = vector.broadcast %cst_73 : f32 to vector<1x1xf32>
    %343 = arith.maximumf %339, %342 : vector<1x1xf32>
    %344 = arith.mulf %341, %343 : vector<1x1xf32>
    %345 = arith.divf %333, %344 : vector<1x1xf32>
    %cst_74 = arith.constant 0.000000e+00 : f32
    %346 = vector.broadcast %cst_74 : f32 to vector<1x1xf32>
    %347 = arith.cmpf olt, %345, %346 : vector<1x1xf32>
    %cst_75 = arith.constant 0.000000e+00 : f32
    %348 = vector.broadcast %cst_75 : f32 to vector<1x1xf32>
    %349 = arith.subf %348, %345 : vector<1x1xf32>
    %350 = arith.mulf %349, %338 : vector<1x1xf32>
    %cst_76 = arith.constant 1.000000e-15 : f32
    %351 = vector.broadcast %cst_76 : f32 to vector<1x1xf32>
    %352 = arith.maximumf %339, %351 : vector<1x1xf32>
    %353 = arith.divf %350, %352 : vector<1x1xf32>
    %cst_77 = arith.constant 0.000000e+00 : f32
    %354 = vector.broadcast %cst_77 : f32 to vector<1x1xf32>
    %355 = arith.select %347, %353, %354 : vector<1x1xi1>, vector<1x1xf32>
    %356 = vector.extract_strided_slice %0 {offsets = [1, 0], sizes = [1, 1024], strides = [1, 1]} : vector<4x1024xf32> to vector<1x1024xf32>
    %357 = vector.broadcast %355 : vector<1x1xf32> to vector<1x1024xf32>
    %358 = arith.mulf %357, %356 : vector<1x1024xf32>
    %359 = arith.addf %323, %358 : vector<1x1024xf32>
    %cst_78 = arith.constant 2.000000e+00 : f32
    %360 = vector.broadcast %cst_78 : f32 to vector<1x1xf32>
    %361 = arith.mulf %360, %355 : vector<1x1xf32>
    %362 = arith.mulf %361, %333 : vector<1x1xf32>
    %363 = arith.addf %330, %362 : vector<1x1xf32>
    %364 = arith.mulf %355, %355 : vector<1x1xf32>
    %365 = arith.mulf %364, %337 : vector<1x1xf32>
    %366 = arith.addf %363, %365 : vector<1x1xf32>
    %367 = vector.extract_strided_slice %1 {offsets = [1, 2], sizes = [1, 1], strides = [1, 1]} : vector<4x4xf32> to vector<1x1xf32>
    %368 = arith.mulf %355, %367 : vector<1x1xf32>
    %369 = arith.addf %336, %368 : vector<1x1xf32>
    %370 = vector.extract_strided_slice %1 {offsets = [2, 2], sizes = [1, 1], strides = [1, 1]} : vector<4x4xf32> to vector<1x1xf32>
    %371 = math.sqrt %366 : vector<1x1xf32>
    %372 = math.sqrt %370 : vector<1x1xf32>
    %cst_79 = arith.constant 9.99999993E-9 : f32
    %373 = vector.broadcast %cst_79 : f32 to vector<1x1xf32>
    %374 = arith.maximumf %371, %373 : vector<1x1xf32>
    %cst_80 = arith.constant 9.99999993E-9 : f32
    %375 = vector.broadcast %cst_80 : f32 to vector<1x1xf32>
    %376 = arith.maximumf %372, %375 : vector<1x1xf32>
    %377 = arith.mulf %374, %376 : vector<1x1xf32>
    %378 = arith.divf %369, %377 : vector<1x1xf32>
    %cst_81 = arith.constant 0.000000e+00 : f32
    %379 = vector.broadcast %cst_81 : f32 to vector<1x1xf32>
    %380 = arith.cmpf olt, %378, %379 : vector<1x1xf32>
    %cst_82 = arith.constant 0.000000e+00 : f32
    %381 = vector.broadcast %cst_82 : f32 to vector<1x1xf32>
    %382 = arith.subf %381, %378 : vector<1x1xf32>
    %383 = arith.mulf %382, %371 : vector<1x1xf32>
    %cst_83 = arith.constant 1.000000e-15 : f32
    %384 = vector.broadcast %cst_83 : f32 to vector<1x1xf32>
    %385 = arith.maximumf %372, %384 : vector<1x1xf32>
    %386 = arith.divf %383, %385 : vector<1x1xf32>
    %cst_84 = arith.constant 0.000000e+00 : f32
    %387 = vector.broadcast %cst_84 : f32 to vector<1x1xf32>
    %388 = arith.select %380, %386, %387 : vector<1x1xi1>, vector<1x1xf32>
    %389 = vector.extract_strided_slice %0 {offsets = [2, 0], sizes = [1, 1024], strides = [1, 1]} : vector<4x1024xf32> to vector<1x1024xf32>
    %390 = vector.broadcast %388 : vector<1x1xf32> to vector<1x1024xf32>
    %391 = arith.mulf %390, %389 : vector<1x1024xf32>
    %392 = arith.addf %359, %391 : vector<1x1024xf32>
    %c3 = arith.constant 3 : index
    %c0_85 = arith.constant 0 : index
    %393 = vector.load %arg1[%c3, %c0_85] : memref<4x1024xf32, #tpu.memory_space<vmem>>, vector<1x1024xf32>
    tpu.vector_store %arg1[%c3, %c0_85], %392 {strides = array<i32>} : memref<4x1024xf32, #tpu.memory_space<vmem>>, vector<1x1024xf32>,
    return
  }
}

</mosaic_0001>

<llo_original>
// kernel: _lambda_.1
$region0: #{_lambda_.1}
  #allocation0 [shape = 'u32[]', space=smem, size = 0x4, offset = 0x4, fixed_abs, tag = 'smem constant byte address 0x4 - core index']
  #allocation1 [shape = 'u32[144,128]{1,0:T(1,128)}', space=vmem, size = 0x12000, scoped, tag = 'internal scratch']
  %s0 = inlined_call_operand.vmem [shape: f32[4,1024], index: 0, kind: input, shape index: {}]
  %s1 = inlined_call_operand.vmem [shape: f32[4,1024], index: 1, kind: output, shape index: {}]
  %s2 = sld [smem:[#allocation0]]
  $region14: #{_lambda_.1} parent=0
    _
  %s4 = ssub.s32 1, %s2
  %s5 = scalar_select 0, %s4, %s2
  // Predicated region
  $region2: #{_lambda_.1} parent=0 // pred_check
    _
  $region3: #{_lambda_.1} parent=0 // pred_check_branch
    %7 = sbr.rel (0) target = $region5
  $region4: #{_lambda_.1} parent=0 // pred_region
    _
  $region5: #{_lambda_.1} parent=0 // pred_fallthru
    _
  %v8 = vld [vmem:[%s0] sm:$0xff]
  %v9 = vld [vmem:[%s0 + $0x8] sm:$0xff]
  %v10 = vld [vmem:[%s0 + $0x10] sm:$0xff]
  %v11 = vld [vmem:[%s0 + $0x18] sm:$0xff]
  %v16 = vcombine.high %v8, %v8
  %v17 = vcombine.high %v9, %v9
  %v18 = vcombine.high %v10, %v10
  %v19 = vcombine.high %v11, %v11
  %24 = vmatprep.subr.mxu0 %v16
  %25 = vmatpush1.xpose.msra.mxu0 %v8
  %26 = vmatprep.subr.mxu0 0.0
  %27 = vmatpush1.xpose.msra.mxu0 0.0
  %28 = vmatprep.subr.mxu0 0.0
  %29 = vmatpush1.xpose.msra.mxu0 0.0
  %30 = vmatprep.subr.mxu0 0.0
  %31 = vmatpush1.xpose.msra.mxu0 0.0
  %32 = vmatprep.subr.mxu0 0.0
  %33 = vmatpush1.xpose.msra.mxu0 0.0
  %34 = vmatprep.subr.mxu0 0.0
  %35 = vmatpush1.xpose.msra.mxu0 0.0
  %36 = vmatprep.subr.mxu0 0.0
  %37 = vmatpush1.xpose.msra.mxu0 0.0
  %38 = vmatprep.subr.mxu0 0.0
  %39 = vmatpush1.xpose.msra.mxu0 0.0
  %40 = vmatprep.subr.mxu0 0.0
  %41 = vmatpush1.xpose.msra.mxu0 0.0
  %42 = vmatprep.subr.mxu0 0.0
  %43 = vmatpush1.xpose.msra.mxu0 0.0
  %44 = vmatprep.subr.mxu0 0.0
  %45 = vmatpush1.xpose.msra.mxu0 0.0
  %46 = vmatprep.subr.mxu0 0.0
  %47 = vmatpush1.xpose.msra.mxu0 0.0
  %48 = vmatprep.subr.mxu0 0.0
  %49 = vmatpush1.xpose.msra.mxu0 0.0
  %50 = vmatprep.subr.mxu0 0.0
  %51 = vmatpush1.xpose.msra.mxu0 0.0
  %52 = vmatprep.subr.mxu0 0.0
  %53 = vmatpush1.xpose.msra.mxu0 0.0
  %54 = vmatprep.subr.mxu0 0.0
  %55 = vmatpush1.xpose.msra.mxu0 0.0
  %56 = vmatprep.subr.mxu0 0.0
  %57 = vmatpush1.xpose.msra.mxu0 0.0
  %58 = vmatprep.subr.mxu0 0.0
  %59 = vmatpush1.xpose.msra.mxu0 0.0
  %60 = vmatprep.subr.mxu0 0.0
  %61 = vmatpush1.xpose.msra.mxu0 0.0
  %62 = vmatprep.subr.mxu0 0.0
  %63 = vmatpush1.xpose.msra.mxu0 0.0
  %64 = vmatprep.subr.mxu0 0.0
  %65 = vmatpush1.xpose.msra.mxu0 0.0
  %66 = vmatprep.subr.mxu0 0.0
  %67 = vmatpush1.xpose.msra.mxu0 0.0
  %68 = vmatprep.subr.mxu0 0.0
  %69 = vmatpush1.xpose.msra.mxu0 0.0
  %70 = vmatprep.subr.mxu0 0.0
  %71 = vmatpush1.xpose.msra.mxu0 0.0
  %72 = vmatprep.subr.mxu0 0.0
  %73 = vmatpush1.xpose.msra.mxu0 0.0
  %74 = vmatprep.subr.mxu0 0.0
  %75 = vmatpush1.xpose.msra.mxu0 0.0
  %76 = vmatprep.subr.mxu0 0.0
  %77 = vmatpush1.xpose.msra.mxu0 0.0
  %78 = vmatprep.subr.mxu0 0.0
  %79 = vmatpush1.xpose.msra.mxu0 0.0
  %80 = vmatprep.subr.mxu0 0.0
  %81 = vmatpush1.xpose.msra.mxu0 0.0
  %82 = vmatprep.subr.mxu0 0.0
  %83 = vmatpush1.xpose.msra.mxu0 0.0
  %84 = vmatprep.subr.mxu0 0.0
  %85 = vmatpush1.xpose.msra.mxu0 0.0
  %86 = vmatprep.subr.mxu0 0.0
  %87 = vmatpush1.xpose.msra.mxu0 0.0
  %88 = vmatprep.mubr.f32.mxu0 %v16
  %89 = vmatmul.mubr.f32.gmra.mrb[0].mxu0 %v8
  %v90 = vpop.f32.mrb[0].mxu0
  %v91 = vadd.f32 0.0, %v90
  %v92 = vpop.f32.mrb[0].mxu0
  %93 = vdwg.mxu0
  %94 = vmatprep.subr.mxu0 %v17
  %95 = vmatpush1.xpose.msra.mxu0 %v9
  %96 = vmatprep.subr.mxu0 0.0
  %97 = vmatpush1.xpose.msra.mxu0 0.0
  %98 = vmatprep.subr.mxu0 0.0
  %99 = vmatpush1.xpose.msra.mxu0 0.0
  %100 = vmatprep.subr.mxu0 0.0
  %101 = vmatpush1.xpose.msra.mxu0 0.0
  %102 = vmatprep.subr.mxu0 0.0
  %103 = vmatpush1.xpose.msra.mxu0 0.0
  %104 = vmatprep.subr.mxu0 0.0
  %105 = vmatpush1.xpose.msra.mxu0 0.0
  %106 = vmatprep.subr.mxu0 0.0
  %107 = vmatpush1.xpose.msra.mxu0 0.0
  %108 = vmatprep.subr.mxu0 0.0
  %109 = vmatpush1.xpose.msra.mxu0 0.0
  %110 = vmatprep.subr.mxu0 0.0
  %111 = vmatpush1.xpose.msra.mxu0 0.0
  %112 = vmatprep.subr.mxu0 0.0
  %113 = vmatpush1.xpose.msra.mxu0 0.0
  %114 = vmatprep.subr.mxu0 0.0
  %115 = vmatpush1.xpose.msra.mxu0 0.0
  %116 = vmatprep.subr.mxu0 0.0
  %117 = vmatpush1.xpose.msra.mxu0 0.0
  %118 = vmatprep.subr.mxu0 0.0
  %119 = vmatpush1.xpose.msra.mxu0 0.0
  %120 = vmatprep.subr.mxu0 0.0
  %121 = vmatpush1.xpose.msra.mxu0 0.0
  %122 = vmatprep.subr.mxu0 0.0
  %123 = vmatpush1.xpose.msra.mxu0 0.0
  %124 = vmatprep.subr.mxu0 0.0
  %125 = vmatpush1.xpose.msra.mxu0 0.0
  %126 = vmatprep.subr.mxu0 0.0
  %127 = vmatpush1.xpose.msra.mxu0 0.0
  %128 = vmatprep.subr.mxu0 0.0
  %129 = vmatpush1.xpose.msra.mxu0 0.0
  %130 = vmatprep.subr.mxu0 0.0
  %131 = vmatpush1.xpose.msra.mxu0 0.0
  %132 = vmatprep.subr.mxu0 0.0
  %133 = vmatpush1.xpose.msra.mxu0 0.0
  %134 = vmatprep.subr.mxu0 0.0
  %135 = vmatpush1.xpose.msra.mxu0 0.0
  %136 = vmatprep.subr.mxu0 0.0
  %137 = vmatpush1.xpose.msra.mxu0 0.0
  %138 = vmatprep.subr.mxu0 0.0
  %139 = vmatpush1.xpose.msra.mxu0 0.0
  %140 = vmatprep.subr.mxu0 0.0
  %141 = vmatpush1.xpose.msra.mxu0 0.0
  %142 = vmatprep.subr.mxu0 0.0
  %143 = vmatpush1.xpose.msra.mxu0 0.0
  %144 = vmatprep.subr.mxu0 0.0
  %145 = vmatpush1.xpose.msra.mxu0 0.0
  %146 = vmatprep.subr.mxu0 0.0
  %147 = vmatpush1.xpose.msra.mxu0 0.0
  %148 = vmatprep.subr.mxu0 0.0
  %149 = vmatpush1.xpose.msra.mxu0 0.0
  %150 = vmatprep.subr.mxu0 0.0
  %151 = vmatpush1.xpose.msra.mxu0 0.0
  %152 = vmatprep.subr.mxu0 0.0
  %153 = vmatpush1.xpose.msra.mxu0 0.0
  %154 = vmatprep.subr.mxu0 0.0
  %155 = vmatpush1.xpose.msra.mxu0 0.0
  %156 = vmatprep.subr.mxu0 0.0
  %157 = vmatpush1.xpose.msra.mxu0 0.0
  %158 = vmatprep.mubr.f32.mxu0 %v17
  %159 = vmatmul.mubr.f32.gmra.mrb[0].mxu0 %v9
  %v160 = vpop.f32.mrb[0].mxu0
  %v161 = vadd.f32 %v91, %v160
  %v162 = vpop.f32.mrb[0].mxu0
  %163 = vdwg.mxu0
  %164 = vmatprep.subr.mxu0 %v18
  %165 = vmatpush1.xpose.msra.mxu0 %v10
  %166 = vmatprep.subr.mxu0 0.0
  %167 = vmatpush1.xpose.msra.mxu0 0.0
  %168 = vmatprep.subr.mxu0 0.0
  %169 = vmatpush1.xpose.msra.mxu0 0.0
  %170 = vmatprep.subr.mxu0 0.0
  %171 = vmatpush1.xpose.msra.mxu0 0.0
  %172 = vmatprep.subr.mxu0 0.0
  %173 = vmatpush1.xpose.msra.mxu0 0.0
  %174 = vmatprep.subr.mxu0 0.0
  %175 = vmatpush1.xpose.msra.mxu0 0.0
  %176 = vmatprep.subr.mxu0 0.0
  %177 = vmatpush1.xpose.msra.mxu0 0.0
  %178 = vmatprep.subr.mxu0 0.0
  %179 = vmatpush1.xpose.msra.mxu0 0.0
  %180 = vmatprep.subr.mxu0 0.0
  %181 = vmatpush1.xpose.msra.mxu0 0.0
  %182 = vmatprep.subr.mxu0 0.0
  %183 = vmatpush1.xpose.msra.mxu0 0.0
  %184 = vmatprep.subr.mxu0 0.0
  %185 = vmatpush1.xpose.msra.mxu0 0.0
  %186 = vmatprep.subr.mxu0 0.0
  %187 = vmatpush1.xpose.msra.mxu0 0.0
  %188 = vmatprep.subr.mxu0 0.0
  %189 = vmatpush1.xpose.msra.mxu0 0.0
  %190 = vmatprep.subr.mxu0 0.0
  %191 = vmatpush1.xpose.msra.mxu0 0.0
  %192 = vmatprep.subr.mxu0 0.0
  %193 = vmatpush1.xpose.msra.mxu0 0.0
  %194 = vmatprep.subr.mxu0 0.0
  %195 = vmatpush1.xpose.msra.mxu0 0.0
  %196 = vmatprep.subr.mxu0 0.0
  %197 = vmatpush1.xpose.msra.mxu0 0.0
  %198 = vmatprep.subr.mxu0 0.0
  %199 = vmatpush1.xpose.msra.mxu0 0.0
  %200 = vmatprep.subr.mxu0 0.0
  %201 = vmatpush1.xpose.msra.mxu0 0.0
  %202 = vmatprep.subr.mxu0 0.0
  %203 = vmatpush1.xpose.msra.mxu0 0.0
  %204 = vmatprep.subr.mxu0 0.0
  %205 = vmatpush1.xpose.msra.mxu0 0.0
  %206 = vmatprep.subr.mxu0 0.0
  %207 = vmatpush1.xpose.msra.mxu0 0.0
  %208 = vmatprep.subr.mxu0 0.0
  %209 = vmatpush1.xpose.msra.mxu0 0.0
  %210 = vmatprep.subr.mxu0 0.0
  %211 = vmatpush1.xpose.msra.mxu0 0.0
  %212 = vmatprep.subr.mxu0 0.0
  %213 = vmatpush1.xpose.msra.mxu0 0.0
  %214 = vmatprep.subr.mxu0 0.0
  %215 = vmatpush1.xpose.msra.mxu0 0.0
  %216 = vmatprep.subr.mxu0 0.0
  %217 = vmatpush1.xpose.msra.mxu0 0.0
  %218 = vmatprep.subr.mxu0 0.0
  %219 = vmatpush1.xpose.msra.mxu0 0.0
  %220 = vmatprep.subr.mxu0 0.0
  %221 = vmatpush1.xpose.msra.mxu0 0.0
  %222 = vmatprep.subr.mxu0 0.0
  %223 = vmatpush1.xpose.msra.mxu0 0.0
  %224 = vmatprep.subr.mxu0 0.0
  %225 = vmatpush1.xpose.msra.mxu0 0.0
  %226 = vmatprep.subr.mxu0 0.0
  %227 = vmatpush1.xpose.msra.mxu0 0.0
  %228 = vmatprep.mubr.f32.mxu0 %v18
  %229 = vmatmul.mubr.f32.gmra.mrb[0].mxu0 %v10
  %v230 = vpop.f32.mrb[0].mxu0
  %v231 = vadd.f32 %v161, %v230
  %v232 = vpop.f32.mrb[0].mxu0
  %233 = vdwg.mxu0
  %234 = vmatprep.subr.mxu0 %v19
  %235 = vmatpush1.xpose.msra.mxu0 %v11
  %236 = vmatprep.subr.mxu0 0.0
  %237 = vmatpush1.xpose.msra.mxu0 0.0
  %238 = vmatprep.subr.mxu0 0.0
  %239 = vmatpush1.xpose.msra.mxu0 0.0
  %240 = vmatprep.subr.mxu0 0.0
  %241 = vmatpush1.xpose.msra.mxu0 0.0
  %242 = vmatprep.subr.mxu0 0.0
  %243 = vmatpush1.xpose.msra.mxu0 0.0
  %244 = vmatprep.subr.mxu0 0.0
  %245 = vmatpush1.xpose.msra.mxu0 0.0
  %246 = vmatprep.subr.mxu0 0.0
  %247 = vmatpush1.xpose.msra.mxu0 0.0
  %248 = vmatprep.subr.mxu0 0.0
  %249 = vmatpush1.xpose.msra.mxu0 0.0
  %250 = vmatprep.subr.mxu0 0.0
  %251 = vmatpush1.xpose.msra.mxu0 0.0
  %252 = vmatprep.subr.mxu0 0.0
  %253 = vmatpush1.xpose.msra.mxu0 0.0
  %254 = vmatprep.subr.mxu0 0.0
  %255 = vmatpush1.xpose.msra.mxu0 0.0
  %256 = vmatprep.subr.mxu0 0.0
  %257 = vmatpush1.xpose.msra.mxu0 0.0
  %258 = vmatprep.subr.mxu0 0.0
  %259 = vmatpush1.xpose.msra.mxu0 0.0
  %260 = vmatprep.subr.mxu0 0.0
  %261 = vmatpush1.xpose.msra.mxu0 0.0
  %262 = vmatprep.subr.mxu0 0.0
  %263 = vmatpush1.xpose.msra.mxu0 0.0
  %264 = vmatprep.subr.mxu0 0.0
  %265 = vmatpush1.xpose.msra.mxu0 0.0
  %266 = vmatprep.subr.mxu0 0.0
  %267 = vmatpush1.xpose.msra.mxu0 0.0
  %268 = vmatprep.subr.mxu0 0.0
  %269 = vmatpush1.xpose.msra.mxu0 0.0
  %270 = vmatprep.subr.mxu0 0.0
  %271 = vmatpush1.xpose.msra.mxu0 0.0
  %272 = vmatprep.subr.mxu0 0.0
  %273 = vmatpush1.xpose.msra.mxu0 0.0
  %274 = vmatprep.subr.mxu0 0.0
  %275 = vmatpush1.xpose.msra.mxu0 0.0
  %276 = vmatprep.subr.mxu0 0.0
  %277 = vmatpush1.xpose.msra.mxu0 0.0
  %278 = vmatprep.subr.mxu0 0.0
  %279 = vmatpush1.xpose.msra.mxu0 0.0
  %280 = vmatprep.subr.mxu0 0.0
  %281 = vmatpush1.xpose.msra.mxu0 0.0
  %282 = vmatprep.subr.mxu0 0.0
  %283 = vmatpush1.xpose.msra.mxu0 0.0
  %284 = vmatprep.subr.mxu0 0.0
  %285 = vmatpush1.xpose.msra.mxu0 0.0
  %286 = vmatprep.subr.mxu0 0.0
  %287 = vmatpush1.xpose.msra.mxu0 0.0
  %288 = vmatprep.subr.mxu0 0.0
  %289 = vmatpush1.xpose.msra.mxu0 0.0
  %290 = vmatprep.subr.mxu0 0.0
  %291 = vmatpush1.xpose.msra.mxu0 0.0
  %292 = vmatprep.subr.mxu0 0.0
  %293 = vmatpush1.xpose.msra.mxu0 0.0
  %294 = vmatprep.subr.mxu0 0.0
  %295 = vmatpush1.xpose.msra.mxu0 0.0
  %296 = vmatprep.subr.mxu0 0.0
  %297 = vmatpush1.xpose.msra.mxu0 0.0
  %298 = vmatprep.mubr.f32.mxu0 %v19
  %299 = vmatmul.mubr.f32.gmra.mrb[0].mxu0 %v11
  %v300 = vpop.f32.mrb[0].mxu0
  %v301 = vadd.f32 %v231, %v300
  %v302 = vpop.f32.mrb[0].mxu0
  %303 = vdwg.mxu0
  %v304 = vrsqrt.pop %v301
  %v305 = vmul.f32 %v301, %v304
  %vm306 = vcmp.eq.f32.partialorder %v301, inf
  %v307 = vsel %vm306, %v301, %v305
  %vm308 = vcmp.eq.f32.partialorder %v301, 0.0
  %v309 = vand.u32 %v301, 2147483648
  %v310 = vsel %vm308, %v309, %v307
  %v311 = vmax.f32 %v310, 1e-08
  %v313 = vrot.slane %v311, 1
  %314 = vrot.lane.b32.xlu0 %v313, 127
  %v315 = vpop.permute.xlu0 %314
  %v317 = vmul.f32 %v311, %v315
  %319 = vrot.lane.b32.xlu0 %v317, 1
  %v320 = vpop.permute.xlu0 %319
  %v322 = vrcp.pop %v320
  %v323 = vmul.f32 %v301, %v322
  %vm324 = vcmp.lt.f32.partialorder %v323, 0.0
  %v325 = vsub.f32 0.0, %v323
  %327 = vrot.lane.b32.xlu0 %v310, 1
  %v328 = vpop.permute.xlu0 %327
  %v330 = vmul.f32 %v325, %v328
  %v331 = vmax.f32 %v310, 1e-15
  %v333 = vrot.slane %v331, 1
  %v335 = vrcp.pop %v333
  %v336 = vmul.f32 %v330, %v335
  %v337 = vsel %vm324, %v336, 0.0
  %339 = vset.pattern.permute.xlu0 1
  %340 = vperm.xlu0 %339, %v337
  %v341 = vpop.permute.xlu0 %340
  %v343 = vlaneseq
  %v344 = vshrl.u32 %v343, 7
  %v345 = vsub.s32 1, %v344
  %v346 = vrot.slane %v8, %v345
  %v347 = vlaneseq
  %v348 = vshrl.u32 %v347, 7
  %v349 = vsub.s32 5, %v348
  %v350 = vrot.slane %v8, %v349
  %v351 = vlaneseq
  %v352 = vshrl.u32 %v351, 7
  %v353 = vsub.s32 1, %v352
  %v354 = vrot.slane %v9, %v353
  %v355 = vlaneseq
  %v356 = vshrl.u32 %v355, 7
  %v357 = vsub.s32 5, %v356
  %v358 = vrot.slane %v9, %v357
  %v359 = vlaneseq
  %v360 = vshrl.u32 %v359, 7
  %v361 = vsub.s32 1, %v360
  %v362 = vrot.slane %v10, %v361
  %v363 = vlaneseq
  %v364 = vshrl.u32 %v363, 7
  %v365 = vsub.s32 5, %v364
  %v366 = vrot.slane %v10, %v365
  %v367 = vlaneseq
  %v368 = vshrl.u32 %v367, 7
  %v369 = vsub.s32 1, %v368
  %v370 = vrot.slane %v11, %v369
  %v371 = vlaneseq
  %v372 = vshrl.u32 %v371, 7
  %v373 = vsub.s32 5, %v372
  %v374 = vrot.slane %v11, %v373
  %v383 = vmul.f32 %v341, %v346
  %v384 = vmul.f32 %v341, %v350
  %v385 = vmul.f32 %v341, %v354
  %v386 = vmul.f32 %v341, %v358
  %v387 = vmul.f32 %v341, %v362
  %v388 = vmul.f32 %v341, %v366
  %v389 = vmul.f32 %v341, %v370
  %v390 = vmul.f32 %v341, %v374
  %v399 = vcombine.low %v383, %v384
  %v400 = vcombine.low %v385, %v386
  %v401 = vcombine.low %v387, %v388
  %v402 = vcombine.low %v389, %v390
  %v407 = vadd.f32 %v8, %v399
  %v408 = vadd.f32 %v9, %v400
  %v409 = vadd.f32 %v10, %v401
  %v410 = vadd.f32 %v11, %v402
  %v411 = vmul.f32 %v337, 2.0
  %v412 = vmul.f32 %v411, %v301
  %414 = vrot.lane.b32.xlu0 %v412, 127
  %v415 = vpop.permute.xlu0 %414
  %v417 = vadd.f32 %v301, %v415
  %v418 = vmul.f32 %v337, %v337
  %v420 = vrot.slane %v301, 1
  %v422 = vmul.f32 %v418, %v420
  %424 = vrot.lane.b32.xlu0 %v422, 127
  %v425 = vpop.permute.xlu0 %424
  %v427 = vadd.f32 %v417, %v425
  %428 = vrot.lane.b32.xlu0 %v420, 127
  %v429 = vpop.permute.xlu0 %428
  %v431 = vmul.f32 %v337, %v429
  %433 = vrot.lane.b32.xlu0 %v431, 1
  %v434 = vpop.permute.xlu0 %433
  %v436 = vadd.f32 %v301, %v434
  %437 = vrot.lane.b32.xlu0 %v420, 126
  %v438 = vpop.permute.xlu0 %437
  %v440 = vmul.f32 %v337, %v438
  %442 = vrot.lane.b32.xlu0 %v440, 2
  %v443 = vpop.permute.xlu0 %442
  %v445 = vadd.f32 %v301, %v443
  %v446 = vrsqrt.pop %v427
  %v447 = vmul.f32 %v427, %v446
  %vm448 = vcmp.eq.f32.partialorder %v427, inf
  %v449 = vsel %vm448, %v427, %v447
  %vm450 = vcmp.eq.f32.partialorder %v427, 0.0
  %v451 = vand.u32 %v427, 2147483648
  %v452 = vsel %vm450, %v451, %v449
  %v453 = vmax.f32 %v452, 1e-08
  %v454 = vrot.slane %v311, 2
  %455 = vrot.lane.b32.xlu0 %v454, 126
  %v456 = vpop.permute.xlu0 %455
  %v458 = vmul.f32 %v453, %v456
  %460 = vrot.lane.b32.xlu0 %v458, 2
  %v461 = vpop.permute.xlu0 %460
  %v463 = vrcp.pop %v461
  %v464 = vmul.f32 %v436, %v463
  %vm465 = vcmp.lt.f32.partialorder %v464, 0.0
  %v466 = vsub.f32 0.0, %v464
  %468 = vrot.lane.b32.xlu0 %v452, 2
  %v469 = vpop.permute.xlu0 %468
  %v471 = vmul.f32 %v466, %v469
  %v472 = vrot.slane %v331, 2
  %v474 = vrcp.pop %v472
  %v475 = vmul.f32 %v471, %v474
  %v476 = vsel %vm465, %v475, 0.0
  %478 = vset.pattern.permute.xlu0 2
  %479 = vperm.xlu0 %478, %v476
  %v480 = vpop.permute.xlu0 %479
  %v482 = vlaneseq
  %v483 = vshrl.u32 %v482, 7
  %v484 = vsub.s32 2, %v483
  %v485 = vrot.slane %v8, %v484
  %v486 = vlaneseq
  %v487 = vshrl.u32 %v486, 7
  %v488 = vsub.s32 6, %v487
  %v489 = vrot.slane %v8, %v488
  %v490 = vlaneseq
  %v491 = vshrl.u32 %v490, 7
  %v492 = vsub.s32 2, %v491
  %v493 = vrot.slane %v9, %v492
  %v494 = vlaneseq
  %v495 = vshrl.u32 %v494, 7
  %v496 = vsub.s32 6, %v495
  %v497 = vrot.slane %v9, %v496
  %v498 = vlaneseq
  %v499 = vshrl.u32 %v498, 7
  %v500 = vsub.s32 2, %v499
  %v501 = vrot.slane %v10, %v500
  %v502 = vlaneseq
  %v503 = vshrl.u32 %v502, 7
  %v504 = vsub.s32 6, %v503
  %v505 = vrot.slane %v10, %v504
  %v506 = vlaneseq
  %v507 = vshrl.u32 %v506, 7
  %v508 = vsub.s32 2, %v507
  %v509 = vrot.slane %v11, %v508
  %v510 = vlaneseq
  %v511 = vshrl.u32 %v510, 7
  %v512 = vsub.s32 6, %v511
  %v513 = vrot.slane %v11, %v512
  %v522 = vmul.f32 %v480, %v485
  %v523 = vmul.f32 %v480, %v489
  %v524 = vmul.f32 %v480, %v493
  %v525 = vmul.f32 %v480, %v497
  %v526 = vmul.f32 %v480, %v501
  %v527 = vmul.f32 %v480, %v505
  %v528 = vmul.f32 %v480, %v509
  %v529 = vmul.f32 %v480, %v513
  %v538 = vcombine.low %v522, %v523
  %v539 = vcombine.low %v524, %v525
  %v540 = vcombine.low %v526, %v527
  %v541 = vcombine.low %v528, %v529
  %v546 = vadd.f32 %v407, %v538
  %v547 = vadd.f32 %v408, %v539
  %v548 = vadd.f32 %v409, %v540
  %v549 = vadd.f32 %v410, %v541
  %v550 = vmul.f32 %v476, 2.0
  %v551 = vmul.f32 %v550, %v436
  %553 = vrot.lane.b32.xlu0 %v551, 126
  %v554 = vpop.permute.xlu0 %553
  %v556 = vadd.f32 %v427, %v554
  %v557 = vmul.f32 %v476, %v476
  %v558 = vrot.slane %v301, 2
  %v560 = vmul.f32 %v557, %v558
  %562 = vrot.lane.b32.xlu0 %v560, 126
  %v563 = vpop.permute.xlu0 %562
  %v565 = vadd.f32 %v556, %v563
  %566 = vrot.lane.b32.xlu0 %v558, 127
  %v567 = vpop.permute.xlu0 %566
  %v569 = vmul.f32 %v476, %v567
  %571 = vrot.lane.b32.xlu0 %v569, 1
  %v572 = vpop.permute.xlu0 %571
  %v574 = vadd.f32 %v445, %v572
  %v575 = vrsqrt.pop %v565
  %v576 = vmul.f32 %v565, %v575
  %vm577 = vcmp.eq.f32.partialorder %v565, inf
  %v578 = vsel %vm577, %v565, %v576
  %vm579 = vcmp.eq.f32.partialorder %v565, 0.0
  %v580 = vand.u32 %v565, 2147483648
  %v581 = vsel %vm579, %v580, %v578
  %v582 = vmax.f32 %v581, 1e-08
  %v583 = vrot.slane %v311, 3
  %584 = vrot.lane.b32.xlu0 %v583, 125
  %v585 = vpop.permute.xlu0 %584
  %v587 = vmul.f32 %v582, %v585
  %589 = vrot.lane.b32.xlu0 %v587, 3
  %v590 = vpop.permute.xlu0 %589
  %v592 = vrcp.pop %v590
  %v593 = vmul.f32 %v574, %v592
  %vm594 = vcmp.lt.f32.partialorder %v593, 0.0
  %v595 = vsub.f32 0.0, %v593
  %597 = vrot.lane.b32.xlu0 %v581, 3
  %v598 = vpop.permute.xlu0 %597
  %v600 = vmul.f32 %v595, %v598
  %v601 = vrot.slane %v331, 3
  %v603 = vrcp.pop %v601
  %v604 = vmul.f32 %v600, %v603
  %v605 = vsel %vm594, %v604, 0.0
  %607 = vset.pattern.permute.xlu0 3
  %608 = vperm.xlu0 %607, %v605
  %v609 = vpop.permute.xlu0 %608
  %v611 = vlaneseq
  %v612 = vshrl.u32 %v611, 7
  %v613 = vsub.s32 3, %v612
  %v614 = vrot.slane %v8, %v613
  %v615 = vlaneseq
  %v616 = vshrl.u32 %v615, 7
  %v617 = vsub.s32 7, %v616
  %v618 = vrot.slane %v8, %v617
  %v619 = vlaneseq
  %v620 = vshrl.u32 %v619, 7
  %v621 = vsub.s32 3, %v620
  %v622 = vrot.slane %v9, %v621
  %v623 = vlaneseq
  %v624 = vshrl.u32 %v623, 7
  %v625 = vsub.s32 7, %v624
  %v626 = vrot.slane %v9, %v625
  %v627 = vlaneseq
  %v628 = vshrl.u32 %v627, 7
  %v629 = vsub.s32 3, %v628
  %v630 = vrot.slane %v10, %v629
  %v631 = vlaneseq
  %v632 = vshrl.u32 %v631, 7
  %v633 = vsub.s32 7, %v632
  %v634 = vrot.slane %v10, %v633
  %v635 = vlaneseq
  %v636 = vshrl.u32 %v635, 7
  %v637 = vsub.s32 3, %v636
  %v638 = vrot.slane %v11, %v637
  %v639 = vlaneseq
  %v640 = vshrl.u32 %v639, 7
  %v641 = vsub.s32 7, %v640
  %v642 = vrot.slane %v11, %v641
  %v651 = vmul.f32 %v609, %v614
  %v652 = vmul.f32 %v609, %v618
  %v653 = vmul.f32 %v609, %v622
  %v654 = vmul.f32 %v609, %v626
  %v655 = vmul.f32 %v609, %v630
  %v656 = vmul.f32 %v609, %v634
  %v657 = vmul.f32 %v609, %v638
  %v658 = vmul.f32 %v609, %v642
  %v667 = vcombine.low %v651, %v652
  %v668 = vcombine.low %v653, %v654
  %v669 = vcombine.low %v655, %v656
  %v670 = vcombine.low %v657, %v658
  %v675 = vadd.f32 %v546, %v667
  %v676 = vadd.f32 %v547, %v668
  %v677 = vadd.f32 %v548, %v669
  %v678 = vadd.f32 %v549, %v670
  %v684 = vunpack.c.l.s4 1966171168
  %v685 = vunpack.c.0.s8 %v684
  %v686 = vlaneseq
  %v687 = vshrl.u32 %v686, 7
  %v688 = vsub.s32 %v685, %v687
  %v689 = vrot.slane %v675, %v688
  %v691 = vunpack.c.l.s4 1966171168
  %v692 = vunpack.c.0.s8 %v691
  %v693 = vlaneseq
  %v694 = vshrl.u32 %v693, 7
  %v695 = vsub.s32 %v692, %v694
  %v696 = vrot.slane %v676, %v695
  %v698 = vunpack.c.l.s4 1966171168
  %v699 = vunpack.c.0.s8 %v698
  %v700 = vlaneseq
  %v701 = vshrl.u32 %v700, 7
  %v702 = vsub.s32 %v699, %v701
  %v703 = vrot.slane %v677, %v702
  %v705 = vunpack.c.l.s4 1966171168
  %v706 = vunpack.c.0.s8 %v705
  %v707 = vlaneseq
  %v708 = vshrl.u32 %v707, 7
  %v709 = vsub.s32 %v706, %v708
  %v710 = vrot.slane %v678, %v709
  %v711 = vcombine.low %v689, %v696
  %v712 = vcombine.low %v703, %v710
  %v714 = vunpack.c.l.s4 1966171168
  %v715 = vunpack.c.0.s8 %v714
  %v716 = vlaneseq
  %v717 = vshrl.u32 %v716, 7
  %v718 = vsub.s32 %v715, %v717
  %v719 = vrot.slane %v711, %v718
  %v721 = vunpack.c.l.s4 1966171168
  %v722 = vunpack.c.0.s8 %v721
  %v723 = vlaneseq
  %v724 = vshrl.u32 %v723, 7
  %v725 = vsub.s32 %v722, %v724
  %v726 = vrot.slane %v712, %v725
  %v727 = vcombine.low %v719, %v726
  %729 = vst [vmem:[%s1] ss:$4 sm:$0xff] %v727
  %v730 = vrot.slane %v317, 7
  %v732 = vrcp.pop %v730
  %v733 = vmul.f32 %v301, %v732
  %vm734 = vcmp.lt.f32.partialorder %v733, 0.0
  %v735 = vsub.f32 0.0, %v733
  %736 = vrot.lane.b32.xlu0 %v310, 127
  %v737 = vpop.permute.xlu0 %736
  %v739 = vmul.f32 %v735, %v737
  %v740 = vrot.slane %v331, 7
  %v742 = vrcp.pop %v740
  %v743 = vmul.f32 %v739, %v742
  %v744 = vsel %vm734, %v743, 0.0
  %746 = vset.pattern.permute.xlu0 0
  %747 = vperm.xlu0 %746, %v744
  %v748 = vpop.permute.xlu0 %747
  %v750 = vlaneseq
  %v751 = vshrl.u32 %v750, 7
  %v752 = vsub.s32 0, %v751
  %v753 = vrot.slane %v8, %v752
  %v754 = vlaneseq
  %v755 = vshrl.u32 %v754, 7
  %v756 = vsub.s32 4, %v755
  %v757 = vrot.slane %v8, %v756
  %v758 = vlaneseq
  %v759 = vshrl.u32 %v758, 7
  %v760 = vsub.s32 0, %v759
  %v761 = vrot.slane %v9, %v760
  %v762 = vlaneseq
  %v763 = vshrl.u32 %v762, 7
  %v764 = vsub.s32 4, %v763
  %v765 = vrot.slane %v9, %v764
  %v766 = vlaneseq
  %v767 = vshrl.u32 %v766, 7
  %v768 = vsub.s32 0, %v767
  %v769 = vrot.slane %v10, %v768
  %v770 = vlaneseq
  %v771 = vshrl.u32 %v770, 7
  %v772 = vsub.s32 4, %v771
  %v773 = vrot.slane %v10, %v772
  %v774 = vlaneseq
  %v775 = vshrl.u32 %v774, 7
  %v776 = vsub.s32 0, %v775
  %v777 = vrot.slane %v11, %v776
  %v778 = vlaneseq
  %v779 = vshrl.u32 %v778, 7
  %v780 = vsub.s32 4, %v779
  %v781 = vrot.slane %v11, %v780
  %v790 = vmul.f32 %v748, %v753
  %v791 = vmul.f32 %v748, %v757
  %v792 = vmul.f32 %v748, %v761
  %v793 = vmul.f32 %v748, %v765
  %v794 = vmul.f32 %v748, %v769
  %v795 = vmul.f32 %v748, %v773
  %v796 = vmul.f32 %v748, %v777
  %v797 = vmul.f32 %v748, %v781
  %v806 = vcombine.low %v790, %v791
  %v807 = vcombine.low %v792, %v793
  %v808 = vcombine.low %v794, %v795
  %v809 = vcombine.low %v796, %v797
  %v814 = vadd.f32 %v8, %v806
  %v815 = vadd.f32 %v9, %v807
  %v816 = vadd.f32 %v10, %v808
  %v817 = vadd.f32 %v11, %v809
  %v818 = vmul.f32 %v744, 2.0
  %v819 = vmul.f32 %v818, %v301
  %821 = vrot.lane.b32.xlu0 %v819, 1
  %v822 = vpop.permute.xlu0 %821
  %v824 = vadd.f32 %v301, %v822
  %v825 = vmul.f32 %v744, %v744
  %v826 = vrot.slane %v301, 7
  %v828 = vmul.f32 %v825, %v826
  %830 = vrot.lane.b32.xlu0 %v828, 1
  %v831 = vpop.permute.xlu0 %830
  %v833 = vadd.f32 %v824, %v831
  %834 = vrot.lane.b32.xlu0 %v826, 126
  %v835 = vpop.permute.xlu0 %834
  %v837 = vmul.f32 %v744, %v835
  %839 = vrot.lane.b32.xlu0 %v837, 2
  %v840 = vpop.permute.xlu0 %839
  %v842 = vadd.f32 %v301, %v840
  %843 = vrot.lane.b32.xlu0 %v826, 125
  %v844 = vpop.permute.xlu0 %843
  %v846 = vmul.f32 %v744, %v844
  %848 = vrot.lane.b32.xlu0 %v846, 3
  %v849 = vpop.permute.xlu0 %848
  %v851 = vadd.f32 %v301, %v849
  %v852 = vrsqrt.pop %v833
  %v853 = vmul.f32 %v833, %v852
  %vm854 = vcmp.eq.f32.partialorder %v833, inf
  %v855 = vsel %vm854, %v833, %v853
  %vm856 = vcmp.eq.f32.partialorder %v833, 0.0
  %v857 = vand.u32 %v833, 2147483648
  %v858 = vsel %vm856, %v857, %v855
  %v859 = vmax.f32 %v858, 1e-08
  %v860 = vmul.f32 %v859, %v315
  %862 = vrot.lane.b32.xlu0 %v860, 1
  %v863 = vpop.permute.xlu0 %862
  %v865 = vrcp.pop %v863
  %v866 = vmul.f32 %v842, %v865
  %vm867 = vcmp.lt.f32.partialorder %v866, 0.0
  %v868 = vsub.f32 0.0, %v866
  %870 = vrot.lane.b32.xlu0 %v858, 1
  %v871 = vpop.permute.xlu0 %870
  %v873 = vmul.f32 %v868, %v871
  %v874 = vmul.f32 %v873, %v335
  %v875 = vsel %vm867, %v874, 0.0
  %877 = vset.pattern.permute.xlu0 2
  %878 = vperm.xlu0 %877, %v875
  %v879 = vpop.permute.xlu0 %878
  %v881 = vmul.f32 %v879, %v485
  %v882 = vmul.f32 %v879, %v489
  %v883 = vmul.f32 %v879, %v493
  %v884 = vmul.f32 %v879, %v497
  %v885 = vmul.f32 %v879, %v501
  %v886 = vmul.f32 %v879, %v505
  %v887 = vmul.f32 %v879, %v509
  %v888 = vmul.f32 %v879, %v513
  %v897 = vcombine.low %v881, %v882
  %v898 = vcombine.low %v883, %v884
  %v899 = vcombine.low %v885, %v886
  %v900 = vcombine.low %v887, %v888
  %v905 = vadd.f32 %v814, %v897
  %v906 = vadd.f32 %v815, %v898
  %v907 = vadd.f32 %v816, %v899
  %v908 = vadd.f32 %v817, %v900
  %v909 = vmul.f32 %v875, 2.0
  %v910 = vmul.f32 %v909, %v842
  %912 = vrot.lane.b32.xlu0 %v910, 127
  %v913 = vpop.permute.xlu0 %912
  %v915 = vadd.f32 %v833, %v913
  %v916 = vmul.f32 %v875, %v875
  %v917 = vmul.f32 %v916, %v420
  %919 = vrot.lane.b32.xlu0 %v917, 127
  %v920 = vpop.permute.xlu0 %919
  %v922 = vadd.f32 %v915, %v920
  %v923 = vmul.f32 %v875, %v429
  %925 = vrot.lane.b32.xlu0 %v923, 1
  %v926 = vpop.permute.xlu0 %925
  %v928 = vadd.f32 %v851, %v926
  %v929 = vrsqrt.pop %v922
  %v930 = vmul.f32 %v922, %v929
  %vm931 = vcmp.eq.f32.partialorder %v922, inf
  %v932 = vsel %vm931, %v922, %v930
  %vm933 = vcmp.eq.f32.partialorder %v922, 0.0
  %v934 = vand.u32 %v922, 2147483648
  %v935 = vsel %vm933, %v934, %v932
  %v936 = vmax.f32 %v935, 1e-08
  %v937 = vmul.f32 %v936, %v456
  %939 = vrot.lane.b32.xlu0 %v937, 2
  %v940 = vpop.permute.xlu0 %939
  %v942 = vrcp.pop %v940
  %v943 = vmul.f32 %v928, %v942
  %vm944 = vcmp.lt.f32.partialorder %v943, 0.0
  %v945 = vsub.f32 0.0, %v943
  %947 = vrot.lane.b32.xlu0 %v935, 2
  %v948 = vpop.permute.xlu0 %947
  %v950 = vmul.f32 %v945, %v948
  %v951 = vmul.f32 %v950, %v474
  %v952 = vsel %vm944, %v951, 0.0
  %954 = vset.pattern.permute.xlu0 3
  %955 = vperm.xlu0 %954, %v952
  %v956 = vpop.permute.xlu0 %955
  %v958 = vmul.f32 %v956, %v614
  %v959 = vmul.f32 %v956, %v618
  %v960 = vmul.f32 %v956, %v622
  %v961 = vmul.f32 %v956, %v626
  %v962 = vmul.f32 %v956, %v630
  %v963 = vmul.f32 %v956, %v634
  %v964 = vmul.f32 %v956, %v638
  %v965 = vmul.f32 %v956, %v642
  %v974 = vcombine.low %v958, %v959
  %v975 = vcombine.low %v960, %v961
  %v976 = vcombine.low %v962, %v963
  %v977 = vcombine.low %v964, %v965
  %v982 = vadd.f32 %v905, %v974
  %v983 = vadd.f32 %v906, %v975
  %v984 = vadd.f32 %v907, %v976
  %v985 = vadd.f32 %v908, %v977
  %v991 = vunpack.c.l.s4 1966171168
  %v992 = vunpack.c.0.s8 %v991
  %v993 = vlaneseq
  %v994 = vshrl.u32 %v993, 7
  %v995 = vsub.s32 %v992, %v994
  %v996 = vrot.slane %v982, %v995
  %v998 = vunpack.c.l.s4 1966171168
  %v999 = vunpack.c.0.s8 %v998
  %v1000 = vlaneseq
  %v1001 = vshrl.u32 %v1000, 7
  %v1002 = vsub.s32 %v999, %v1001
  %v1003 = vrot.slane %v983, %v1002
  %v1005 = vunpack.c.l.s4 1966171168
  %v1006 = vunpack.c.0.s8 %v1005
  %v1007 = vlaneseq
  %v1008 = vshrl.u32 %v1007, 7
  %v1009 = vsub.s32 %v1006, %v1008
  %v1010 = vrot.slane %v984, %v1009
  %v1012 = vunpack.c.l.s4 1966171168
  %v1013 = vunpack.c.0.s8 %v1012
  %v1014 = vlaneseq
  %v1015 = vshrl.u32 %v1014, 7
  %v1016 = vsub.s32 %v1013, %v1015
  %v1017 = vrot.slane %v985, %v1016
  %v1018 = vcombine.high %v996, %v1003
  %v1019 = vcombine.high %v1010, %v1017
  %v1021 = vunpack.c.l.s4 1966171168
  %v1022 = vunpack.c.0.s8 %v1021
  %v1023 = vlaneseq
  %v1024 = vshrl.u32 %v1023, 7
  %v1025 = vsub.s32 %v1022, %v1024
  %v1026 = vrot.slane %v1018, %v1025
  %v1028 = vunpack.c.l.s4 1966171168
  %v1029 = vunpack.c.0.s8 %v1028
  %v1030 = vlaneseq
  %v1031 = vshrl.u32 %v1030, 7
  %v1032 = vsub.s32 %v1029, %v1031
  %v1033 = vrot.slane %v1019, %v1032
  %v1034 = vcombine.low %v1026, %v1033
  %s1036 = scalar_lea.vmem %s1, 1
  %1037 = vst [vmem:[%s1036] ss:$4 sm:$0xff] %v1034
  %v1038 = vrot.slane %v311, 6
  %1039 = vrot.lane.b32.xlu0 %v1038, 2
  %v1040 = vpop.permute.xlu0 %1039
  %v1042 = vmul.f32 %v311, %v1040
  %1044 = vrot.lane.b32.xlu0 %v1042, 126
  %v1045 = vpop.permute.xlu0 %1044
  %v1047 = vrcp.pop %v1045
  %v1048 = vmul.f32 %v301, %v1047
  %vm1049 = vcmp.lt.f32.partialorder %v1048, 0.0
  %v1050 = vsub.f32 0.0, %v1048
  %1051 = vrot.lane.b32.xlu0 %v310, 126
  %v1052 = vpop.permute.xlu0 %1051
  %v1054 = vmul.f32 %v1050, %v1052
  %v1055 = vrot.slane %v331, 6
  %v1057 = vrcp.pop %v1055
  %v1058 = vmul.f32 %v1054, %v1057
  %v1059 = vsel %vm1049, %v1058, 0.0
  %1061 = vset.pattern.permute.xlu0 0
  %1062 = vperm.xlu0 %1061, %v1059
  %v1063 = vpop.permute.xlu0 %1062
  %v1065 = vmul.f32 %v1063, %v753
  %v1066 = vmul.f32 %v1063, %v757
  %v1067 = vmul.f32 %v1063, %v761
  %v1068 = vmul.f32 %v1063, %v765
  %v1069 = vmul.f32 %v1063, %v769
  %v1070 = vmul.f32 %v1063, %v773
  %v1071 = vmul.f32 %v1063, %v777
  %v1072 = vmul.f32 %v1063, %v781
  %v1081 = vcombine.low %v1065, %v1066
  %v1082 = vcombine.low %v1067, %v1068
  %v1083 = vcombine.low %v1069, %v1070
  %v1084 = vcombine.low %v1071, %v1072
  %v1089 = vadd.f32 %v8, %v1081
  %v1090 = vadd.f32 %v9, %v1082
  %v1091 = vadd.f32 %v10, %v1083
  %v1092 = vadd.f32 %v11, %v1084
  %v1093 = vmul.f32 %v1059, 2.0
  %v1094 = vmul.f32 %v1093, %v301
  %1096 = vrot.lane.b32.xlu0 %v1094, 2
  %v1097 = vpop.permute.xlu0 %1096
  %v1099 = vadd.f32 %v301, %v1097
  %v1100 = vmul.f32 %v1059, %v1059
  %v1101 = vrot.slane %v301, 6
  %v1103 = vmul.f32 %v1100, %v1101
  %1105 = vrot.lane.b32.xlu0 %v1103, 2
  %v1106 = vpop.permute.xlu0 %1105
  %v1108 = vadd.f32 %v1099, %v1106
  %1109 = vrot.lane.b32.xlu0 %v1101, 127
  %v1110 = vpop.permute.xlu0 %1109
  %v1112 = vmul.f32 %v1059, %v1110
  %1114 = vrot.lane.b32.xlu0 %v1112, 1
  %v1115 = vpop.permute.xlu0 %1114
  %v1117 = vadd.f32 %v301, %v1115
  %1118 = vrot.lane.b32.xlu0 %v1101, 125
  %v1119 = vpop.permute.xlu0 %1118
  %v1121 = vmul.f32 %v1059, %v1119
  %1123 = vrot.lane.b32.xlu0 %v1121, 3
  %v1124 = vpop.permute.xlu0 %1123
  %v1126 = vadd.f32 %v301, %v1124
  %v1127 = vrsqrt.pop %v1108
  %v1128 = vmul.f32 %v1108, %v1127
  %vm1129 = vcmp.eq.f32.partialorder %v1108, inf
  %v1130 = vsel %vm1129, %v1108, %v1128
  %vm1131 = vcmp.eq.f32.partialorder %v1108, 0.0
  %v1132 = vand.u32 %v1108, 2147483648
  %v1133 = vsel %vm1131, %v1132, %v1130
  %v1134 = vmax.f32 %v1133, 1e-08
  %v1135 = vrot.slane %v311, 7
  %1136 = vrot.lane.b32.xlu0 %v1135, 1
  %v1137 = vpop.permute.xlu0 %1136
  %v1139 = vmul.f32 %v1134, %v1137
  %1141 = vrot.lane.b32.xlu0 %v1139, 127
  %v1142 = vpop.permute.xlu0 %1141
  %v1144 = vrcp.pop %v1142
  %v1145 = vmul.f32 %v1117, %v1144
  %vm1146 = vcmp.lt.f32.partialorder %v1145, 0.0
  %v1147 = vsub.f32 0.0, %v1145
  %1149 = vrot.lane.b32.xlu0 %v1133, 127
  %v1150 = vpop.permute.xlu0 %1149
  %v1152 = vmul.f32 %v1147, %v1150
  %v1153 = vmul.f32 %v1152, %v742
  %v1154 = vsel %vm1146, %v1153, 0.0
  %1156 = vset.pattern.permute.xlu0 1
  %1157 = vperm.xlu0 %1156, %v1154
  %v1158 = vpop.permute.xlu0 %1157
  %v1160 = vmul.f32 %v1158, %v346
  %v1161 = vmul.f32 %v1158, %v350
  %v1162 = vmul.f32 %v1158, %v354
  %v1163 = vmul.f32 %v1158, %v358
  %v1164 = vmul.f32 %v1158, %v362
  %v1165 = vmul.f32 %v1158, %v366
  %v1166 = vmul.f32 %v1158, %v370
  %v1167 = vmul.f32 %v1158, %v374
  %v1176 = vcombine.low %v1160, %v1161
  %v1177 = vcombine.low %v1162, %v1163
  %v1178 = vcombine.low %v1164, %v1165
  %v1179 = vcombine.low %v1166, %v1167
  %v1184 = vadd.f32 %v1089, %v1176
  %v1185 = vadd.f32 %v1090, %v1177
  %v1186 = vadd.f32 %v1091, %v1178
  %v1187 = vadd.f32 %v1092, %v1179
  %v1188 = vmul.f32 %v1154, 2.0
  %v1189 = vmul.f32 %v1188, %v1117
  %1191 = vrot.lane.b32.xlu0 %v1189, 1
  %v1192 = vpop.permute.xlu0 %1191
  %v1194 = vadd.f32 %v1108, %v1192
  %v1195 = vmul.f32 %v1154, %v1154
  %v1196 = vmul.f32 %v1195, %v826
  %1198 = vrot.lane.b32.xlu0 %v1196, 1
  %v1199 = vpop.permute.xlu0 %1198
  %v1201 = vadd.f32 %v1194, %v1199
  %v1202 = vmul.f32 %v1154, %v835
  %1204 = vrot.lane.b32.xlu0 %v1202, 2
  %v1205 = vpop.permute.xlu0 %1204
  %v1207 = vadd.f32 %v1126, %v1205
  %v1208 = vrsqrt.pop %v1201
  %v1209 = vmul.f32 %v1201, %v1208
  %vm1210 = vcmp.eq.f32.partialorder %v1201, inf
  %v1211 = vsel %vm1210, %v1201, %v1209
  %vm1212 = vcmp.eq.f32.partialorder %v1201, 0.0
  %v1213 = vand.u32 %v1201, 2147483648
  %v1214 = vsel %vm1212, %v1213, %v1211
  %v1215 = vmax.f32 %v1214, 1e-08
  %v1216 = vmul.f32 %v1215, %v315
  %1218 = vrot.lane.b32.xlu0 %v1216, 1
  %v1219 = vpop.permute.xlu0 %1218
  %v1221 = vrcp.pop %v1219
  %v1222 = vmul.f32 %v1207, %v1221
  %vm1223 = vcmp.lt.f32.partialorder %v1222, 0.0
  %v1224 = vsub.f32 0.0, %v1222
  %1226 = vrot.lane.b32.xlu0 %v1214, 1
  %v1227 = vpop.permute.xlu0 %1226
  %v1229 = vmul.f32 %v1224, %v1227
  %v1230 = vmul.f32 %v1229, %v335
  %v1231 = vsel %vm1223, %v1230, 0.0
  %1233 = vset.pattern.permute.xlu0 3
  %1234 = vperm.xlu0 %1233, %v1231
  %v1235 = vpop.permute.xlu0 %1234
  %v1237 = vmul.f32 %v1235, %v614
  %v1238 = vmul.f32 %v1235, %v618
  %v1239 = vmul.f32 %v1235, %v622
  %v1240 = vmul.f32 %v1235, %v626
  %v1241 = vmul.f32 %v1235, %v630
  %v1242 = vmul.f32 %v1235, %v634
  %v1243 = vmul.f32 %v1235, %v638
  %v1244 = vmul.f32 %v1235, %v642
  %v1253 = vcombine.low %v1237, %v1238
  %v1254 = vcombine.low %v1239, %v1240
  %v1255 = vcombine.low %v1241, %v1242
  %v1256 = vcombine.low %v1243, %v1244
  %v1261 = vadd.f32 %v1184, %v1253
  %v1262 = vadd.f32 %v1185, %v1254
  %v1263 = vadd.f32 %v1186, %v1255
  %v1264 = vadd.f32 %v1187, %v1256
  %v1270 = vunpack.c.l.s4 1966171168
  %v1271 = vunpack.c.0.s8 %v1270
  %v1272 = vlaneseq
  %v1273 = vshrl.u32 %v1272, 7
  %v1274 = vsub.s32 %v1271, %v1273
  %v1275 = vrot.slane %v1261, %v1274
  %v1277 = vunpack.c.l.s4 1966171168
  %v1278 = vunpack.c.0.s8 %v1277
  %v1279 = vlaneseq
  %v1280 = vshrl.u32 %v1279, 7
  %v1281 = vsub.s32 %v1278, %v1280
  %v1282 = vrot.slane %v1262, %v1281
  %v1284 = vunpack.c.l.s4 1966171168
  %v1285 = vunpack.c.0.s8 %v1284
  %v1286 = vlaneseq
  %v1287 = vshrl.u32 %v1286, 7
  %v1288 = vsub.s32 %v1285, %v1287
  %v1289 = vrot.slane %v1263, %v1288
  %v1291 = vunpack.c.l.s4 1966171168
  %v1292 = vunpack.c.0.s8 %v1291
  %v1293 = vlaneseq
  %v1294 = vshrl.u32 %v1293, 7
  %v1295 = vsub.s32 %v1292, %v1294
  %v1296 = vrot.slane %v1264, %v1295
  %v1297 = vcombine.low %v1275, %v1282
  %v1298 = vcombine.low %v1289, %v1296
  %v1300 = vunpack.c.l.s4 1966171168
  %v1301 = vunpack.c.0.s8 %v1300
  %v1302 = vlaneseq
  %v1303 = vshrl.u32 %v1302, 7
  %v1304 = vsub.s32 %v1301, %v1303
  %v1305 = vrot.slane %v1297, %v1304
  %v1307 = vunpack.c.l.s4 1966171168
  %v1308 = vunpack.c.0.s8 %v1307
  %v1309 = vlaneseq
  %v1310 = vshrl.u32 %v1309, 7
  %v1311 = vsub.s32 %v1308, %v1310
  %v1312 = vrot.slane %v1298, %v1311
  %v1313 = vcombine.high %v1305, %v1312
  %s1315 = scalar_lea.vmem %s1, 2
  %1316 = vst [vmem:[%s1315] ss:$4 sm:$0xff] %v1313
  %v1317 = vrot.slane %v311, 5
  %1318 = vrot.lane.b32.xlu0 %v1317, 3
  %v1319 = vpop.permute.xlu0 %1318
  %v1321 = vmul.f32 %v311, %v1319
  %1323 = vrot.lane.b32.xlu0 %v1321, 125
  %v1324 = vpop.permute.xlu0 %1323
  %v1326 = vrcp.pop %v1324
  %v1327 = vmul.f32 %v301, %v1326
  %vm1328 = vcmp.lt.f32.partialorder %v1327, 0.0
  %v1329 = vsub.f32 0.0, %v1327
  %1330 = vrot.lane.b32.xlu0 %v310, 125
  %v1331 = vpop.permute.xlu0 %1330
  %v1333 = vmul.f32 %v1329, %v1331
  %v1334 = vrot.slane %v331, 5
  %v1336 = vrcp.pop %v1334
  %v1337 = vmul.f32 %v1333, %v1336
  %v1338 = vsel %vm1328, %v1337, 0.0
  %1340 = vset.pattern.permute.xlu0 0
  %1341 = vperm.xlu0 %1340, %v1338
  %v1342 = vpop.permute.xlu0 %1341
  %v1344 = vmul.f32 %v1342, %v753
  %v1345 = vmul.f32 %v1342, %v757
  %v1346 = vmul.f32 %v1342, %v761
  %v1347 = vmul.f32 %v1342, %v765
  %v1348 = vmul.f32 %v1342, %v769
  %v1349 = vmul.f32 %v1342, %v773
  %v1350 = vmul.f32 %v1342, %v777
  %v1351 = vmul.f32 %v1342, %v781
  %v1360 = vcombine.low %v1344, %v1345
  %v1361 = vcombine.low %v1346, %v1347
  %v1362 = vcombine.low %v1348, %v1349
  %v1363 = vcombine.low %v1350, %v1351
  %v1368 = vadd.f32 %v8, %v1360
  %v1369 = vadd.f32 %v9, %v1361
  %v1370 = vadd.f32 %v10, %v1362
  %v1371 = vadd.f32 %v11, %v1363
  %v1372 = vmul.f32 %v1338, 2.0
  %v1373 = vmul.f32 %v1372, %v301
  %1375 = vrot.lane.b32.xlu0 %v1373, 3
  %v1376 = vpop.permute.xlu0 %1375
  %v1378 = vadd.f32 %v301, %v1376
  %v1379 = vmul.f32 %v1338, %v1338
  %v1380 = vrot.slane %v301, 5
  %v1382 = vmul.f32 %v1379, %v1380
  %1384 = vrot.lane.b32.xlu0 %v1382, 3
  %v1385 = vpop.permute.xlu0 %1384
  %v1387 = vadd.f32 %v1378, %v1385
  %1388 = vrot.lane.b32.xlu0 %v1380, 127
  %v1389 = vpop.permute.xlu0 %1388
  %v1391 = vmul.f32 %v1338, %v1389
  %1393 = vrot.lane.b32.xlu0 %v1391, 1
  %v1394 = vpop.permute.xlu0 %1393
  %v1396 = vadd.f32 %v301, %v1394
  %1397 = vrot.lane.b32.xlu0 %v1380, 126
  %v1398 = vpop.permute.xlu0 %1397
  %v1400 = vmul.f32 %v1338, %v1398
  %1402 = vrot.lane.b32.xlu0 %v1400, 2
  %v1403 = vpop.permute.xlu0 %1402
  %v1405 = vadd.f32 %v301, %v1403
  %v1406 = vrsqrt.pop %v1387
  %v1407 = vmul.f32 %v1387, %v1406
  %vm1408 = vcmp.eq.f32.partialorder %v1387, inf
  %v1409 = vsel %vm1408, %v1387, %v1407
  %vm1410 = vcmp.eq.f32.partialorder %v1387, 0.0
  %v1411 = vand.u32 %v1387, 2147483648
  %v1412 = vsel %vm1410, %v1411, %v1409
  %v1413 = vmax.f32 %v1412, 1e-08
  %v1414 = vmul.f32 %v1413, %v1040
  %1416 = vrot.lane.b32.xlu0 %v1414, 126
  %v1417 = vpop.permute.xlu0 %1416
  %v1419 = vrcp.pop %v1417
  %v1420 = vmul.f32 %v1396, %v1419
  %vm1421 = vcmp.lt.f32.partialorder %v1420, 0.0
  %v1422 = vsub.f32 0.0, %v1420
  %1424 = vrot.lane.b32.xlu0 %v1412, 126
  %v1425 = vpop.permute.xlu0 %1424
  %v1427 = vmul.f32 %v1422, %v1425
  %v1428 = vmul.f32 %v1427, %v1057
  %v1429 = vsel %vm1421, %v1428, 0.0
  %1431 = vset.pattern.permute.xlu0 1
  %1432 = vperm.xlu0 %1431, %v1429
  %v1433 = vpop.permute.xlu0 %1432
  %v1435 = vmul.f32 %v1433, %v346
  %v1436 = vmul.f32 %v1433, %v350
  %v1437 = vmul.f32 %v1433, %v354
  %v1438 = vmul.f32 %v1433, %v358
  %v1439 = vmul.f32 %v1433, %v362
  %v1440 = vmul.f32 %v1433, %v366
  %v1441 = vmul.f32 %v1433, %v370
  %v1442 = vmul.f32 %v1433, %v374
  %v1451 = vcombine.low %v1435, %v1436
  %v1452 = vcombine.low %v1437, %v1438
  %v1453 = vcombine.low %v1439, %v1440
  %v1454 = vcombine.low %v1441, %v1442
  %v1459 = vadd.f32 %v1368, %v1451
  %v1460 = vadd.f32 %v1369, %v1452
  %v1461 = vadd.f32 %v1370, %v1453
  %v1462 = vadd.f32 %v1371, %v1454
  %v1463 = vmul.f32 %v1429, 2.0
  %v1464 = vmul.f32 %v1463, %v1396
  %1466 = vrot.lane.b32.xlu0 %v1464, 2
  %v1467 = vpop.permute.xlu0 %1466
  %v1469 = vadd.f32 %v1387, %v1467
  %v1470 = vmul.f32 %v1429, %v1429
  %v1471 = vmul.f32 %v1470, %v1101
  %1473 = vrot.lane.b32.xlu0 %v1471, 2
  %v1474 = vpop.permute.xlu0 %1473
  %v1476 = vadd.f32 %v1469, %v1474
  %v1477 = vmul.f32 %v1429, %v1110
  %1479 = vrot.lane.b32.xlu0 %v1477, 1
  %v1480 = vpop.permute.xlu0 %1479
  %v1482 = vadd.f32 %v1405, %v1480
  %v1483 = vrsqrt.pop %v1476
  %v1484 = vmul.f32 %v1476, %v1483
  %vm1485 = vcmp.eq.f32.partialorder %v1476, inf
  %v1486 = vsel %vm1485, %v1476, %v1484
  %vm1487 = vcmp.eq.f32.partialorder %v1476, 0.0
  %v1488 = vand.u32 %v1476, 2147483648
  %v1489 = vsel %vm1487, %v1488, %v1486
  %v1490 = vmax.f32 %v1489, 1e-08
  %v1491 = vmul.f32 %v1490, %v1137
  %1493 = vrot.lane.b32.xlu0 %v1491, 127
  %v1494 = vpop.permute.xlu0 %1493
  %v1496 = vrcp.pop %v1494
  %v1497 = vmul.f32 %v1482, %v1496
  %vm1498 = vcmp.lt.f32.partialorder %v1497, 0.0
  %v1499 = vsub.f32 0.0, %v1497
  %1501 = vrot.lane.b32.xlu0 %v1489, 127
  %v1502 = vpop.permute.xlu0 %1501
  %v1504 = vmul.f32 %v1499, %v1502
  %v1505 = vmul.f32 %v1504, %v742
  %v1506 = vsel %vm1498, %v1505, 0.0
  %1508 = vset.pattern.permute.xlu0 2
  %1509 = vperm.xlu0 %1508, %v1506
  %v1510 = vpop.permute.xlu0 %1509
  %v1512 = vmul.f32 %v1510, %v485
  %v1513 = vmul.f32 %v1510, %v489
  %v1514 = vmul.f32 %v1510, %v493
  %v1515 = vmul.f32 %v1510, %v497
  %v1516 = vmul.f32 %v1510, %v501
  %v1517 = vmul.f32 %v1510, %v505
  %v1518 = vmul.f32 %v1510, %v509
  %v1519 = vmul.f32 %v1510, %v513
  %v1528 = vcombine.low %v1512, %v1513
  %v1529 = vcombine.low %v1514, %v1515
  %v1530 = vcombine.low %v1516, %v1517
  %v1531 = vcombine.low %v1518, %v1519
  %v1536 = vadd.f32 %v1459, %v1528
  %v1537 = vadd.f32 %v1460, %v1529
  %v1538 = vadd.f32 %v1461, %v1530
  %v1539 = vadd.f32 %v1462, %v1531
  %v1545 = vunpack.c.l.s4 1966171168
  %v1546 = vunpack.c.0.s8 %v1545
  %v1547 = vlaneseq
  %v1548 = vshrl.u32 %v1547, 7
  %v1549 = vsub.s32 %v1546, %v1548
  %v1550 = vrot.slane %v1536, %v1549
  %v1552 = vunpack.c.l.s4 1966171168
  %v1553 = vunpack.c.0.s8 %v1552
  %v1554 = vlaneseq
  %v1555 = vshrl.u32 %v1554, 7
  %v1556 = vsub.s32 %v1553, %v1555
  %v1557 = vrot.slane %v1537, %v1556
  %v1559 = vunpack.c.l.s4 1966171168
  %v1560 = vunpack.c.0.s8 %v1559
  %v1561 = vlaneseq
  %v1562 = vshrl.u32 %v1561, 7
  %v1563 = vsub.s32 %v1560, %v1562
  %v1564 = vrot.slane %v1538, %v1563
  %v1566 = vunpack.c.l.s4 1966171168
  %v1567 = vunpack.c.0.s8 %v1566
  %v1568 = vlaneseq
  %v1569 = vshrl.u32 %v1568, 7
  %v1570 = vsub.s32 %v1567, %v1569
  %v1571 = vrot.slane %v1539, %v1570
  %v1572 = vcombine.high %v1550, %v1557
  %v1573 = vcombine.high %v1564, %v1571
  %v1575 = vunpack.c.l.s4 1966171168
  %v1576 = vunpack.c.0.s8 %v1575
  %v1577 = vlaneseq
  %v1578 = vshrl.u32 %v1577, 7
  %v1579 = vsub.s32 %v1576, %v1578
  %v1580 = vrot.slane %v1572, %v1579
  %v1582 = vunpack.c.l.s4 1966171168
  %v1583 = vunpack.c.0.s8 %v1582
  %v1584 = vlaneseq
  %v1585 = vshrl.u32 %v1584, 7
  %v1586 = vsub.s32 %v1583, %v1585
  %v1587 = vrot.slane %v1573, %v1586
  %v1588 = vcombine.high %v1580, %v1587
  %s1590 = scalar_lea.vmem %s1, 3
  %1591 = vst [vmem:[%s1590] ss:$4 sm:$0xff] %v1588
  // Predicated region
  $region6: #{_lambda_.1} parent=0 // pred_check
    _
  $region7: #{_lambda_.1} parent=0 // pred_check_branch
    %1593 = sbr.rel (0) target = $region9
  $region8: #{_lambda_.1} parent=0 // pred_region
    _
  $region9: #{_lambda_.1} parent=0 // pred_fallthru
    _
  // Predicated region
  $region10: #{_lambda_.1} parent=0 // pred_check
    _
  $region11: #{_lambda_.1} parent=0 // pred_check_branch
    %1595 = sbr.rel (0) target = $region13
  $region12: #{_lambda_.1} parent=0 // pred_region
    _
  $region13: #{_lambda_.1} parent=0 // pred_fallthru
    _

</llo_original>
